<compile_context>
chip_gen: v7x
topology: tpu7x:2x2x1
jax: 0.10.0
libtpu: 0.0.40
codegen_flags: <defaults>
</compile_context>

<pallas_src>
import jax
import jax.numpy as jnp
from jax import lax
from jax.experimental import pallas as pl
from jax.experimental.pallas import tpu as pltpu


def _round_up(x, m):
    return ((x + m - 1) // m) * m


def _vmem_capacity_bytes():
    try:
        return int(pltpu.get_tpu_info().vmem_capacity_bytes)
    except Exception:
        return 128 * 1024 * 1024


def _make_kernel(b_blk, nt_tile, nc_tile, h8, hp, h_valid, nc_valid, needs_mask):
    def kernel(ci_ref, tx_ref, wst_ref, wsn_ref, wt_ref, bt_ref,
               out_ref, m_s, l_s, acc_s, q_s):
        k = pl.program_id(2)

        # ---- per-(batch-block, target-tile) init: softmax state + hoisted query ----
        @pl.when(k == 0)
        def _():
            m_s[...] = jnp.full_like(m_s, -jnp.inf)
            l_s[...] = jnp.zeros_like(l_s)
            acc_s[...] = jnp.zeros_like(acc_s)
            tx = tx_ref[...]                                  # (b, nt, 2)
            wsn = wsn_ref[...]                                # (8, h8): rows 0-1 wc, row 2 bc
            q_s[...] = (tx[:, :, 0:1] * wsn[0:1, :]
                        + tx[:, :, 1:2] * wsn[1:2, :]
                        + wsn[2:3, :])                        # (b, nt, h8)  query (pre-scaled)

        ci = ci_ref[...]                                      # (b, 3, nc)  rows = [x, y, obs]
        wst = wst_ref[...]                                    # (h8, 8): cols 0-2 wi, 3 bi, 4-5 wc, 6 bc
        cx = ci[:, 0:1, :]
        cy = ci[:, 1:2, :]
        co = ci[:, 2:3, :]

        # Context projections in transposed layout: hidden on sublanes, context lane-dense.
        value_t = (wst[:, 0:1] * cx + wst[:, 1:2] * cy
                   + wst[:, 2:3] * co + wst[:, 3:4])          # (b, h8, nc)
        key_t = wst[:, 4:5] * cx + wst[:, 5:6] * cy + wst[:, 6:7]   # (b, h8, nc)

        # Laplace L1 logits, accumulated over the hidden dim so the largest live temporary
        # is the (b, nt, nc) slab (nc lane-dense); no (nt, nc, H) 4-D broadcast and no
        # 128-lane padding of H on this VPU-bound path.  (For very large H this static
        # unroll would be chunked; typical H here is a few tens.)
        q = q_s[...]                                          # (b, nt, h8)
        dist = jnp.abs(key_t[:, 0:1, :] - q[:, :, 0:1])       # (b, nt, nc)
        for h in range(1, h_valid):
            dist = dist + jnp.abs(key_t[:, h:h + 1, :] - q[:, :, h:h + 1])
        logits = -dist

        if needs_mask:
            col = lax.broadcasted_iota(jnp.int32, (1, 1, nc_tile), 2)
            valid = (k * nc_tile + col) < nc_valid
            logits = jnp.where(valid, logits, -1e30)

        # Online softmax across context tiles.
        m_prev = m_s[...]
        m_new = jnp.maximum(m_prev, jnp.max(logits, axis=-1, keepdims=True))
        alpha = jnp.exp(m_prev - m_new)
        p = jnp.exp(logits - m_new)                           # (b, nt, nc)
        l_s[...] = alpha * l_s[...] + jnp.sum(p, axis=-1, keepdims=True)
        acc_s[...] = alpha * acc_s[...] + jnp.einsum(
            'btc,bhc->bth',
            p.astype(jnp.bfloat16), value_t.astype(jnp.bfloat16),
            preferred_element_type=jnp.float32)               # bf16 MXU, f32 accumulate
        m_s[...] = m_new

        @pl.when(k == pl.num_programs(2) - 1)
        def _():
            rep = acc_s[...] / l_s[...]                       # exact softmax normalization
            rep2 = rep.reshape(b_blk * nt_tile, h8).astype(jnp.bfloat16)
            out = jnp.dot(rep2, wt_ref[...],
                          preferred_element_type=jnp.float32) + bt_ref[...]
            out_ref[...] = out.reshape(b_blk, nt_tile, hp).astype(out_ref.dtype)

    return kernel


def location_encoder(context_x, context_y, target_x, params, *,
                     b_block=None, nc_tile_max=None, nt_tile_max=128):
    """Pallas implementation of LocationEncoder.forward."""
    cx = context_x[..., 0:2].astype(jnp.float32)
    cy = context_y.astype(jnp.float32)
    tx = target_x[..., 0:2].astype(jnp.float32)

    B, Nc, _ = cx.shape
    Nt = tx.shape[1]
    H = params["wt"].shape[0]

    # Generation-aware tiling: v7x has 64 MiB VMEM per TensorCore, v5e/v6e have 128 MiB.
    small_vmem = _vmem_capacity_bytes() < (96 << 20)
    if b_block is None:
        b_block = 4 if small_vmem else 8
    if nc_tile_max is None:
        nc_tile_max = 256 if small_vmem else 512
    vmem_limit = (40 << 20) if small_vmem else (64 << 20)

    H8 = _round_up(H, 8)            # hidden dim for the VPU / accumulator path
    Hp = _round_up(H, 128)          # lane-dense hidden dim for the final MXU / output

    # Batch blocking; cap so the leading "parallel" axis has >= 2 steps (v7x dual TC).
    Bblk = max(1, min(b_block, B // 2 if B >= 2 else 1))
    Bp = _round_up(B, Bblk)

    nt_tile = min(_round_up(Nt, 8), _round_up(nt_tile_max, 8))
    Ntp = _round_up(Nt, nt_tile)

    nc_tile = min(_round_up(Nc, 128), _round_up(nc_tile_max, 128))
    Ncp = _round_up(Nc, nc_tile)

    # Context packed + transposed: (Bp, 3, Ncp), rows = [x, y, obs] (layout plumbing in XLA).
    ci_t = jnp.transpose(jnp.concatenate([cx, cy], axis=-1), (0, 2, 1))
    ci_t = jnp.pad(ci_t, ((0, Bp - B), (0, 0), (0, Ncp - Nc)))
    txp = jnp.pad(tx, ((0, Bp - B), (0, Ntp - Nt), (0, 0)))

    # Small projection weights; the Laplace 0.5 scale is folded into wc / bc.
    wi = params["wi"].astype(jnp.float32)                     # (3, H)
    bi = params["bi"].astype(jnp.float32).reshape(1, H)
    wc = params["wc"].astype(jnp.float32) * 0.5               # (2, H)
    bc = params["bc"].astype(jnp.float32).reshape(1, H) * 0.5

    # Transposed pack (hidden on sublanes): cols [wi_x, wi_y, wi_obs, bi, wc_x, wc_y, bc, 0].
    wst = jnp.zeros((H8, 8), jnp.float32)
    wst = wst.at[:H, 0:3].set(wi.T)
    wst = wst.at[:H, 3].set(bi[0])
    wst = wst.at[:H, 4:6].set(wc.T)
    wst = wst.at[:H, 6].set(bc[0])

    # Natural pack (hidden on lanes) for the query projection: rows [wc_x, wc_y, bc].
    wsn = jnp.zeros((8, H8), jnp.float32)
    wsn = wsn.at[0:2, :H].set(wc)
    wsn = wsn.at[2, :H].set(bc[0])

    # Final projection: bf16 weights (MXU-native), f32 bias, lane-dense output columns.
    wt = jnp.zeros((H8, Hp), jnp.float32).at[:H, :H].set(
        params["wt"].astype(jnp.float32)).astype(jnp.bfloat16)
    bt = jnp.zeros((1, Hp), jnp.float32).at[:, :H].set(
        params["bt"].astype(jnp.float32).reshape(1, H))

    kernel = _make_kernel(Bblk, nt_tile, nc_tile, H8, Hp, H, Nc, Ncp != Nc)

    grid_spec = pltpu.PrefetchScalarGridSpec(
        num_scalar_prefetch=0,
        grid=(Bp // Bblk, Ntp // nt_tile, Ncp // nc_tile),
        in_specs=[
            pl.BlockSpec((Bblk, 3, nc_tile), lambda b, t, k: (b, 0, k)),
            pl.BlockSpec((Bblk, nt_tile, 2), lambda b, t, k: (b, t, 0)),
            pl.BlockSpec((H8, 8), lambda b, t, k: (0, 0)),
            pl.BlockSpec((8, H8), lambda b, t, k: (0, 0)),
            pl.BlockSpec((H8, Hp), lambda b, t, k: (0, 0)),
            pl.BlockSpec((1, Hp), lambda b, t, k: (0, 0)),
        ],
        out_specs=pl.BlockSpec((Bblk, nt_tile, Hp), lambda b, t, k: (b, t, 0)),
        scratch_shapes=[
            pltpu.VMEM((Bblk, nt_tile, 1), jnp.float32),    # running max m
            pltpu.VMEM((Bblk, nt_tile, 1), jnp.float32),    # running denom l
            pltpu.VMEM((Bblk, nt_tile, H8), jnp.float32),   # weighted-value accumulator
            pltpu.VMEM((Bblk, nt_tile, H8), jnp.float32),   # hoisted query projection
        ],
    )

    out = pl.pallas_call(
        kernel,
        out_shape=jax.ShapeDtypeStruct((Bp, Ntp, Hp), jnp.float32),
        grid_spec=grid_spec,
        compiler_params=pltpu.CompilerParams(
            dimension_semantics=("parallel", "parallel", "arbitrary"),
            vmem_limit_bytes=vmem_limit,
        ),
    )(ci_t, txp, wst, wsn, wt, bt)

    return out[:B, :Nt, :H]


def _reference(context_x, context_y, target_x, params):
    """Pure-JAX reference matching the PyTorch forward exactly."""
    enc_in = jnp.concatenate([context_x[..., 0:2], context_y], axis=-1)
    value = enc_in @ params["wi"] + params["bi"][0]
    key = context_x[..., 0:2] @ params["wc"] + params["bc"][0]
    query = target_x[..., 0:2] @ params["wc"] + params["bc"][0]
    query = query[:, :, None, :]       # (B, Nt, 1, H)
    key = key[:, None, :, :]           # (B, 1, Nc, H)
    weights = -jnp.abs((key - query) * 0.5)
    weights = jnp.sum(weights, axis=-1)            # (B, Nt, Nc)
    weight = jax.nn.softmax(weights, axis=-1)
    rep = jnp.einsum("btc,bch->bth", weight, value)
    rep = rep @ params["wt"] + params["bt"][0]
    return rep


def _init_params(key, num_hidden):
    """Deterministic PyTorch-Linear-style init: U(-1/sqrt(fan_in), 1/sqrt(fan_in))."""
    ks = jax.random.split(key, 6)

    def lin(kw, kb, fan_in, fan_out):
        bound = 1.0 / jnp.sqrt(fan_in)
        w = jax.random.uniform(kw, (fan_in, fan_out), jnp.float32, -bound, bound)
        b = jax.random.uniform(kb, (1, fan_out), jnp.float32, -bound, bound)
        return w, b

    wi, bi = lin(ks[0], ks[1], 3, num_hidden)
    wc, bc = lin(ks[2], ks[3], 2, num_hidden)
    wt, bt = lin(ks[4], ks[5], num_hidden, num_hidden)
    return {"wi": wi, "bi": bi, "wc": wc, "bc": bc, "wt": wt, "bt": bt}


if __name__ == "__main__":
    B, Nc, Nt, H = 2, 8, 8, 32

    root = jax.random.PRNGKey(0)
    k_params, k_cx, k_cy, k_tx = jax.random.split(root, 4)

    params = _init_params(k_params, H)
    context_x = jax.random.normal(k_cx, (B, Nc, 2), jnp.float32)
    context_y = jax.random.normal(k_cy, (B, Nc, 1), jnp.float32)
    target_x = jax.random.normal(k_tx, (B, Nt, 2), jnp.float32)

    out = location_encoder(context_x, context_y, target_x, params)
    out = jax.block_until_ready(out)

    ref = _reference(context_x, context_y, target_x, params)
    assert out.shape == (B, Nt, H), out.shape
    # Distance/softmax math is f32 and the normalization is exact; the tolerance covers
    # only the bf16 MXU operand casting requested by the performance review.
    err = float(jnp.max(jnp.abs(out - ref)))
    assert jnp.allclose(out, ref, atol=2e-2, rtol=2e-2), err

    print("KERNEL_OK")
</pallas_src>

<mosaic_0001>
module attributes {stable_mosaic.version = 11 : i64} {
  func.func @kernel(%arg0: i32, %arg1: i32, %arg2: i32, %arg3: memref<1x3x128xf32, #tpu.memory_space<vmem>>, %arg4: memref<1x8x2xf32, #tpu.memory_space<vmem>>, %arg5: memref<32x8xf32, #tpu.memory_space<vmem>>, %arg6: memref<8x32xf32, #tpu.memory_space<vmem>>, %arg7: memref<32x128xbf16, #tpu.memory_space<vmem>>, %arg8: memref<1x128xf32, #tpu.memory_space<vmem>>, %arg9: memref<1x8x128xf32, #tpu.memory_space<vmem>>, %arg10: memref<1x8x1xf32, #tpu.memory_space<vmem>>, %arg11: memref<1x8x1xf32, #tpu.memory_space<vmem>>, %arg12: memref<1x8x32xf32, #tpu.memory_space<vmem>>, %arg13: memref<1x8x32xf32, #tpu.memory_space<vmem>>) attributes {dimension_semantics = [#tpu.dimension_semantics<parallel>, #tpu.dimension_semantics<parallel>, #tpu.dimension_semantics<arbitrary>], iteration_bounds = array<i64: 2, 1, 1>, scalar_prefetch = 0 : i64, scratch_operands = 4 : i64, tpu.core_type = #tpu.core_type<tc>, window_params = [{transform_indices = @transform_0, window_bounds = array<i64: 1, 3, 128>}, {transform_indices = @transform_1, window_bounds = array<i64: 1, 8, 2>}, {pipeline_mode = #tpu.pipeline_mode<synchronous>, transform_indices = @transform_2, window_bounds = array<i64: 32, 8>}, {pipeline_mode = #tpu.pipeline_mode<synchronous>, transform_indices = @transform_3, window_bounds = array<i64: 8, 32>}, {pipeline_mode = #tpu.pipeline_mode<synchronous>, transform_indices = @transform_4, window_bounds = array<i64: 32, 128>}, {pipeline_mode = #tpu.pipeline_mode<synchronous>, transform_indices = @transform_5, window_bounds = array<i64: 1, 128>}, {transform_indices = @transform_6, window_bounds = array<i64: 1, 8, 128>}]} {
    %c0_i32 = arith.constant 0 : i32
    %0 = arith.cmpi eq, %arg2, %c0_i32 : i32
    %1 = arith.extui %0 : i1 to i32
    %c0_i32_0 = arith.constant 0 : i32
    %2 = arith.cmpi ne, %1, %c0_i32_0 : i32
    scf.if %2 {
      %cst_32 = arith.constant 0xFF800000 : f32
      %307 = vector.broadcast %cst_32 : f32 to vector<1x8x1xf32>
      %c0_33 = arith.constant 0 : index
      %c0_34 = arith.constant 0 : index
      %c0_35 = arith.constant 0 : index
      %308 = vector.load %arg10[%c0_33, %c0_34, %c0_35] : memref<1x8x1xf32, #tpu.memory_space<vmem>>, vector<1x8x1xf32>
      tpu.vector_store %arg10[%c0_33, %c0_34, %c0_35], %307 {strides = array<i32>} : memref<1x8x1xf32, #tpu.memory_space<vmem>>, vector<1x8x1xf32>,
      %cst_36 = arith.constant 0.000000e+00 : f32
      %309 = vector.broadcast %cst_36 : f32 to vector<1x8x1xf32>
      %c0_37 = arith.constant 0 : index
      %c0_38 = arith.constant 0 : index
      %c0_39 = arith.constant 0 : index
      %310 = vector.load %arg11[%c0_37, %c0_38, %c0_39] : memref<1x8x1xf32, #tpu.memory_space<vmem>>, vector<1x8x1xf32>
      tpu.vector_store %arg11[%c0_37, %c0_38, %c0_39], %309 {strides = array<i32>} : memref<1x8x1xf32, #tpu.memory_space<vmem>>, vector<1x8x1xf32>,
      %cst_40 = arith.constant 0.000000e+00 : f32
      %311 = vector.broadcast %cst_40 : f32 to vector<1x8x32xf32>
      %c0_41 = arith.constant 0 : index
      %c0_42 = arith.constant 0 : index
      %c0_43 = arith.constant 0 : index
      %312 = vector.load %arg12[%c0_41, %c0_42, %c0_43] : memref<1x8x32xf32, #tpu.memory_space<vmem>>, vector<1x8x32xf32>
      tpu.vector_store %arg12[%c0_41, %c0_42, %c0_43], %311 {strides = array<i32>} : memref<1x8x32xf32, #tpu.memory_space<vmem>>, vector<1x8x32xf32>,
      %c0_44 = arith.constant 0 : index
      %c0_45 = arith.constant 0 : index
      %c0_46 = arith.constant 0 : index
      %313 = vector.load %arg4[%c0_44, %c0_45, %c0_46] : memref<1x8x2xf32, #tpu.memory_space<vmem>>, vector<1x8x2xf32>
      %c0_47 = arith.constant 0 : index
      %c0_48 = arith.constant 0 : index
      %314 = vector.load %arg6[%c0_47, %c0_48] : memref<8x32xf32, #tpu.memory_space<vmem>>, vector<8x32xf32>
      %315 = vector.extract_strided_slice %313 {offsets = [0, 0, 0], sizes = [1, 8, 1], strides = [1, 1, 1]} : vector<1x8x2xf32> to vector<1x8x1xf32>
      %316 = vector.extract_strided_slice %314 {offsets = [0, 0], sizes = [1, 32], strides = [1, 1]} : vector<8x32xf32> to vector<1x32xf32>
      %317 = vector.shape_cast %316 : vector<1x32xf32> to vector<1x1x32xf32>
      %318 = vector.broadcast %315 : vector<1x8x1xf32> to vector<1x8x32xf32>
      %319 = vector.broadcast %317 : vector<1x1x32xf32> to vector<1x8x32xf32>
      %320 = arith.mulf %318, %319 : vector<1x8x32xf32>
      %321 = vector.extract_strided_slice %313 {offsets = [0, 0, 1], sizes = [1, 8, 1], strides = [1, 1, 1]} : vector<1x8x2xf32> to vector<1x8x1xf32>
      %322 = vector.extract_strided_slice %314 {offsets = [1, 0], sizes = [1, 32], strides = [1, 1]} : vector<8x32xf32> to vector<1x32xf32>
      %323 = vector.shape_cast %322 : vector<1x32xf32> to vector<1x1x32xf32>
      %324 = vector.broadcast %321 : vector<1x8x1xf32> to vector<1x8x32xf32>
      %325 = vector.broadcast %323 : vector<1x1x32xf32> to vector<1x8x32xf32>
      %326 = arith.mulf %324, %325 : vector<1x8x32xf32>
      %327 = arith.addf %320, %326 : vector<1x8x32xf32>
      %328 = vector.extract_strided_slice %314 {offsets = [2, 0], sizes = [1, 32], strides = [1, 1]} : vector<8x32xf32> to vector<1x32xf32>
      %329 = vector.shape_cast %328 : vector<1x32xf32> to vector<1x1x32xf32>
      %330 = vector.broadcast %329 : vector<1x1x32xf32> to vector<1x8x32xf32>
      %331 = arith.addf %327, %330 : vector<1x8x32xf32>
      %c0_49 = arith.constant 0 : index
      %c0_50 = arith.constant 0 : index
      %c0_51 = arith.constant 0 : index
      %332 = vector.load %arg13[%c0_49, %c0_50, %c0_51] : memref<1x8x32xf32, #tpu.memory_space<vmem>>, vector<1x8x32xf32>
      tpu.vector_store %arg13[%c0_49, %c0_50, %c0_51], %331 {strides = array<i32>} : memref<1x8x32xf32, #tpu.memory_space<vmem>>, vector<1x8x32xf32>,
    } else {
    }
    %c0 = arith.constant 0 : index
    %c0_1 = arith.constant 0 : index
    %c0_2 = arith.constant 0 : index
    %3 = vector.load %arg3[%c0, %c0_1, %c0_2] : memref<1x3x128xf32, #tpu.memory_space<vmem>>, vector<1x3x128xf32>
    %c0_3 = arith.constant 0 : index
    %c0_4 = arith.constant 0 : index
    %4 = vector.load %arg5[%c0_3, %c0_4] : memref<32x8xf32, #tpu.memory_space<vmem>>, vector<32x8xf32>
    %5 = vector.extract_strided_slice %3 {offsets = [0, 0, 0], sizes = [1, 1, 128], strides = [1, 1, 1]} : vector<1x3x128xf32> to vector<1x1x128xf32>
    %6 = vector.extract_strided_slice %3 {offsets = [0, 1, 0], sizes = [1, 1, 128], strides = [1, 1, 1]} : vector<1x3x128xf32> to vector<1x1x128xf32>
    %7 = vector.extract_strided_slice %3 {offsets = [0, 2, 0], sizes = [1, 1, 128], strides = [1, 1, 1]} : vector<1x3x128xf32> to vector<1x1x128xf32>
    %8 = vector.extract_strided_slice %4 {offsets = [0, 0], sizes = [32, 1], strides = [1, 1]} : vector<32x8xf32> to vector<32x1xf32>
    %9 = vector.shape_cast %8 : vector<32x1xf32> to vector<1x32x1xf32>
    %10 = vector.broadcast %9 : vector<1x32x1xf32> to vector<1x32x128xf32>
    %11 = vector.broadcast %5 : vector<1x1x128xf32> to vector<1x32x128xf32>
    %12 = arith.mulf %10, %11 : vector<1x32x128xf32>
    %13 = vector.extract_strided_slice %4 {offsets = [0, 1], sizes = [32, 1], strides = [1, 1]} : vector<32x8xf32> to vector<32x1xf32>
    %14 = vector.shape_cast %13 : vector<32x1xf32> to vector<1x32x1xf32>
    %15 = vector.broadcast %14 : vector<1x32x1xf32> to vector<1x32x128xf32>
    %16 = vector.broadcast %6 : vector<1x1x128xf32> to vector<1x32x128xf32>
    %17 = arith.mulf %15, %16 : vector<1x32x128xf32>
    %18 = arith.addf %12, %17 : vector<1x32x128xf32>
    %19 = vector.extract_strided_slice %4 {offsets = [0, 2], sizes = [32, 1], strides = [1, 1]} : vector<32x8xf32> to vector<32x1xf32>
    %20 = vector.shape_cast %19 : vector<32x1xf32> to vector<1x32x1xf32>
    %21 = vector.broadcast %20 : vector<1x32x1xf32> to vector<1x32x128xf32>
    %22 = vector.broadcast %7 : vector<1x1x128xf32> to vector<1x32x128xf32>
    %23 = arith.mulf %21, %22 : vector<1x32x128xf32>
    %24 = arith.addf %18, %23 : vector<1x32x128xf32>
    %25 = vector.extract_strided_slice %4 {offsets = [0, 3], sizes = [32, 1], strides = [1, 1]} : vector<32x8xf32> to vector<32x1xf32>
    %26 = vector.shape_cast %25 : vector<32x1xf32> to vector<1x32x1xf32>
    %27 = vector.broadcast %26 : vector<1x32x1xf32> to vector<1x32x128xf32>
    %28 = arith.addf %24, %27 : vector<1x32x128xf32>
    %29 = vector.extract_strided_slice %4 {offsets = [0, 4], sizes = [32, 1], strides = [1, 1]} : vector<32x8xf32> to vector<32x1xf32>
    %30 = vector.shape_cast %29 : vector<32x1xf32> to vector<1x32x1xf32>
    %31 = vector.broadcast %30 : vector<1x32x1xf32> to vector<1x32x128xf32>
    %32 = vector.broadcast %5 : vector<1x1x128xf32> to vector<1x32x128xf32>
    %33 = arith.mulf %31, %32 : vector<1x32x128xf32>
    %34 = vector.extract_strided_slice %4 {offsets = [0, 5], sizes = [32, 1], strides = [1, 1]} : vector<32x8xf32> to vector<32x1xf32>
    %35 = vector.shape_cast %34 : vector<32x1xf32> to vector<1x32x1xf32>
    %36 = vector.broadcast %35 : vector<1x32x1xf32> to vector<1x32x128xf32>
    %37 = vector.broadcast %6 : vector<1x1x128xf32> to vector<1x32x128xf32>
    %38 = arith.mulf %36, %37 : vector<1x32x128xf32>
    %39 = arith.addf %33, %38 : vector<1x32x128xf32>
    %40 = vector.extract_strided_slice %4 {offsets = [0, 6], sizes = [32, 1], strides = [1, 1]} : vector<32x8xf32> to vector<32x1xf32>
    %41 = vector.shape_cast %40 : vector<32x1xf32> to vector<1x32x1xf32>
    %42 = vector.broadcast %41 : vector<1x32x1xf32> to vector<1x32x128xf32>
    %43 = arith.addf %39, %42 : vector<1x32x128xf32>
    %c0_5 = arith.constant 0 : index
    %c0_6 = arith.constant 0 : index
    %c0_7 = arith.constant 0 : index
    %44 = vector.load %arg13[%c0_5, %c0_6, %c0_7] : memref<1x8x32xf32, #tpu.memory_space<vmem>>, vector<1x8x32xf32>
    %45 = vector.extract_strided_slice %43 {offsets = [0, 0, 0], sizes = [1, 1, 128], strides = [1, 1, 1]} : vector<1x32x128xf32> to vector<1x1x128xf32>
    %46 = vector.extract_strided_slice %44 {offsets = [0, 0, 0], sizes = [1, 8, 1], strides = [1, 1, 1]} : vector<1x8x32xf32> to vector<1x8x1xf32>
    %47 = vector.broadcast %45 : vector<1x1x128xf32> to vector<1x8x128xf32>
    %48 = vector.broadcast %46 : vector<1x8x1xf32> to vector<1x8x128xf32>
    %49 = arith.subf %47, %48 : vector<1x8x128xf32>
    %50 = math.absf %49 : vector<1x8x128xf32>
    %51 = vector.extract_strided_slice %43 {offsets = [0, 1, 0], sizes = [1, 1, 128], strides = [1, 1, 1]} : vector<1x32x128xf32> to vector<1x1x128xf32>
    %52 = vector.extract_strided_slice %44 {offsets = [0, 0, 1], sizes = [1, 8, 1], strides = [1, 1, 1]} : vector<1x8x32xf32> to vector<1x8x1xf32>
    %53 = vector.broadcast %51 : vector<1x1x128xf32> to vector<1x8x128xf32>
    %54 = vector.broadcast %52 : vector<1x8x1xf32> to vector<1x8x128xf32>
    %55 = arith.subf %53, %54 : vector<1x8x128xf32>
    %56 = math.absf %55 : vector<1x8x128xf32>
    %57 = arith.addf %50, %56 : vector<1x8x128xf32>
    %58 = vector.extract_strided_slice %43 {offsets = [0, 2, 0], sizes = [1, 1, 128], strides = [1, 1, 1]} : vector<1x32x128xf32> to vector<1x1x128xf32>
    %59 = vector.extract_strided_slice %44 {offsets = [0, 0, 2], sizes = [1, 8, 1], strides = [1, 1, 1]} : vector<1x8x32xf32> to vector<1x8x1xf32>
    %60 = vector.broadcast %58 : vector<1x1x128xf32> to vector<1x8x128xf32>
    %61 = vector.broadcast %59 : vector<1x8x1xf32> to vector<1x8x128xf32>
    %62 = arith.subf %60, %61 : vector<1x8x128xf32>
    %63 = math.absf %62 : vector<1x8x128xf32>
    %64 = arith.addf %57, %63 : vector<1x8x128xf32>
    %65 = vector.extract_strided_slice %43 {offsets = [0, 3, 0], sizes = [1, 1, 128], strides = [1, 1, 1]} : vector<1x32x128xf32> to vector<1x1x128xf32>
    %66 = vector.extract_strided_slice %44 {offsets = [0, 0, 3], sizes = [1, 8, 1], strides = [1, 1, 1]} : vector<1x8x32xf32> to vector<1x8x1xf32>
    %67 = vector.broadcast %65 : vector<1x1x128xf32> to vector<1x8x128xf32>
    %68 = vector.broadcast %66 : vector<1x8x1xf32> to vector<1x8x128xf32>
    %69 = arith.subf %67, %68 : vector<1x8x128xf32>
    %70 = math.absf %69 : vector<1x8x128xf32>
    %71 = arith.addf %64, %70 : vector<1x8x128xf32>
    %72 = vector.extract_strided_slice %43 {offsets = [0, 4, 0], sizes = [1, 1, 128], strides = [1, 1, 1]} : vector<1x32x128xf32> to vector<1x1x128xf32>
    %73 = vector.extract_strided_slice %44 {offsets = [0, 0, 4], sizes = [1, 8, 1], strides = [1, 1, 1]} : vector<1x8x32xf32> to vector<1x8x1xf32>
    %74 = vector.broadcast %72 : vector<1x1x128xf32> to vector<1x8x128xf32>
    %75 = vector.broadcast %73 : vector<1x8x1xf32> to vector<1x8x128xf32>
    %76 = arith.subf %74, %75 : vector<1x8x128xf32>
    %77 = math.absf %76 : vector<1x8x128xf32>
    %78 = arith.addf %71, %77 : vector<1x8x128xf32>
    %79 = vector.extract_strided_slice %43 {offsets = [0, 5, 0], sizes = [1, 1, 128], strides = [1, 1, 1]} : vector<1x32x128xf32> to vector<1x1x128xf32>
    %80 = vector.extract_strided_slice %44 {offsets = [0, 0, 5], sizes = [1, 8, 1], strides = [1, 1, 1]} : vector<1x8x32xf32> to vector<1x8x1xf32>
    %81 = vector.broadcast %79 : vector<1x1x128xf32> to vector<1x8x128xf32>
    %82 = vector.broadcast %80 : vector<1x8x1xf32> to vector<1x8x128xf32>
    %83 = arith.subf %81, %82 : vector<1x8x128xf32>
    %84 = math.absf %83 : vector<1x8x128xf32>
    %85 = arith.addf %78, %84 : vector<1x8x128xf32>
    %86 = vector.extract_strided_slice %43 {offsets = [0, 6, 0], sizes = [1, 1, 128], strides = [1, 1, 1]} : vector<1x32x128xf32> to vector<1x1x128xf32>
    %87 = vector.extract_strided_slice %44 {offsets = [0, 0, 6], sizes = [1, 8, 1], strides = [1, 1, 1]} : vector<1x8x32xf32> to vector<1x8x1xf32>
    %88 = vector.broadcast %86 : vector<1x1x128xf32> to vector<1x8x128xf32>
    %89 = vector.broadcast %87 : vector<1x8x1xf32> to vector<1x8x128xf32>
    %90 = arith.subf %88, %89 : vector<1x8x128xf32>
    %91 = math.absf %90 : vector<1x8x128xf32>
    %92 = arith.addf %85, %91 : vector<1x8x128xf32>
    %93 = vector.extract_strided_slice %43 {offsets = [0, 7, 0], sizes = [1, 1, 128], strides = [1, 1, 1]} : vector<1x32x128xf32> to vector<1x1x128xf32>
    %94 = vector.extract_strided_slice %44 {offsets = [0, 0, 7], sizes = [1, 8, 1], strides = [1, 1, 1]} : vector<1x8x32xf32> to vector<1x8x1xf32>
    %95 = vector.broadcast %93 : vector<1x1x128xf32> to vector<1x8x128xf32>
    %96 = vector.broadcast %94 : vector<1x8x1xf32> to vector<1x8x128xf32>
    %97 = arith.subf %95, %96 : vector<1x8x128xf32>
    %98 = math.absf %97 : vector<1x8x128xf32>
    %99 = arith.addf %92, %98 : vector<1x8x128xf32>
    %100 = vector.extract_strided_slice %43 {offsets = [0, 8, 0], sizes = [1, 1, 128], strides = [1, 1, 1]} : vector<1x32x128xf32> to vector<1x1x128xf32>
    %101 = vector.extract_strided_slice %44 {offsets = [0, 0, 8], sizes = [1, 8, 1], strides = [1, 1, 1]} : vector<1x8x32xf32> to vector<1x8x1xf32>
    %102 = vector.broadcast %100 : vector<1x1x128xf32> to vector<1x8x128xf32>
    %103 = vector.broadcast %101 : vector<1x8x1xf32> to vector<1x8x128xf32>
    %104 = arith.subf %102, %103 : vector<1x8x128xf32>
    %105 = math.absf %104 : vector<1x8x128xf32>
    %106 = arith.addf %99, %105 : vector<1x8x128xf32>
    %107 = vector.extract_strided_slice %43 {offsets = [0, 9, 0], sizes = [1, 1, 128], strides = [1, 1, 1]} : vector<1x32x128xf32> to vector<1x1x128xf32>
    %108 = vector.extract_strided_slice %44 {offsets = [0, 0, 9], sizes = [1, 8, 1], strides = [1, 1, 1]} : vector<1x8x32xf32> to vector<1x8x1xf32>
    %109 = vector.broadcast %107 : vector<1x1x128xf32> to vector<1x8x128xf32>
    %110 = vector.broadcast %108 : vector<1x8x1xf32> to vector<1x8x128xf32>
    %111 = arith.subf %109, %110 : vector<1x8x128xf32>
    %112 = math.absf %111 : vector<1x8x128xf32>
    %113 = arith.addf %106, %112 : vector<1x8x128xf32>
    %114 = vector.extract_strided_slice %43 {offsets = [0, 10, 0], sizes = [1, 1, 128], strides = [1, 1, 1]} : vector<1x32x128xf32> to vector<1x1x128xf32>
    %115 = vector.extract_strided_slice %44 {offsets = [0, 0, 10], sizes = [1, 8, 1], strides = [1, 1, 1]} : vector<1x8x32xf32> to vector<1x8x1xf32>
    %116 = vector.broadcast %114 : vector<1x1x128xf32> to vector<1x8x128xf32>
    %117 = vector.broadcast %115 : vector<1x8x1xf32> to vector<1x8x128xf32>
    %118 = arith.subf %116, %117 : vector<1x8x128xf32>
    %119 = math.absf %118 : vector<1x8x128xf32>
    %120 = arith.addf %113, %119 : vector<1x8x128xf32>
    %121 = vector.extract_strided_slice %43 {offsets = [0, 11, 0], sizes = [1, 1, 128], strides = [1, 1, 1]} : vector<1x32x128xf32> to vector<1x1x128xf32>
    %122 = vector.extract_strided_slice %44 {offsets = [0, 0, 11], sizes = [1, 8, 1], strides = [1, 1, 1]} : vector<1x8x32xf32> to vector<1x8x1xf32>
    %123 = vector.broadcast %121 : vector<1x1x128xf32> to vector<1x8x128xf32>
    %124 = vector.broadcast %122 : vector<1x8x1xf32> to vector<1x8x128xf32>
    %125 = arith.subf %123, %124 : vector<1x8x128xf32>
    %126 = math.absf %125 : vector<1x8x128xf32>
    %127 = arith.addf %120, %126 : vector<1x8x128xf32>
    %128 = vector.extract_strided_slice %43 {offsets = [0, 12, 0], sizes = [1, 1, 128], strides = [1, 1, 1]} : vector<1x32x128xf32> to vector<1x1x128xf32>
    %129 = vector.extract_strided_slice %44 {offsets = [0, 0, 12], sizes = [1, 8, 1], strides = [1, 1, 1]} : vector<1x8x32xf32> to vector<1x8x1xf32>
    %130 = vector.broadcast %128 : vector<1x1x128xf32> to vector<1x8x128xf32>
    %131 = vector.broadcast %129 : vector<1x8x1xf32> to vector<1x8x128xf32>
    %132 = arith.subf %130, %131 : vector<1x8x128xf32>
    %133 = math.absf %132 : vector<1x8x128xf32>
    %134 = arith.addf %127, %133 : vector<1x8x128xf32>
    %135 = vector.extract_strided_slice %43 {offsets = [0, 13, 0], sizes = [1, 1, 128], strides = [1, 1, 1]} : vector<1x32x128xf32> to vector<1x1x128xf32>
    %136 = vector.extract_strided_slice %44 {offsets = [0, 0, 13], sizes = [1, 8, 1], strides = [1, 1, 1]} : vector<1x8x32xf32> to vector<1x8x1xf32>
    %137 = vector.broadcast %135 : vector<1x1x128xf32> to vector<1x8x128xf32>
    %138 = vector.broadcast %136 : vector<1x8x1xf32> to vector<1x8x128xf32>
    %139 = arith.subf %137, %138 : vector<1x8x128xf32>
    %140 = math.absf %139 : vector<1x8x128xf32>
    %141 = arith.addf %134, %140 : vector<1x8x128xf32>
    %142 = vector.extract_strided_slice %43 {offsets = [0, 14, 0], sizes = [1, 1, 128], strides = [1, 1, 1]} : vector<1x32x128xf32> to vector<1x1x128xf32>
    %143 = vector.extract_strided_slice %44 {offsets = [0, 0, 14], sizes = [1, 8, 1], strides = [1, 1, 1]} : vector<1x8x32xf32> to vector<1x8x1xf32>
    %144 = vector.broadcast %142 : vector<1x1x128xf32> to vector<1x8x128xf32>
    %145 = vector.broadcast %143 : vector<1x8x1xf32> to vector<1x8x128xf32>
    %146 = arith.subf %144, %145 : vector<1x8x128xf32>
    %147 = math.absf %146 : vector<1x8x128xf32>
    %148 = arith.addf %141, %147 : vector<1x8x128xf32>
    %149 = vector.extract_strided_slice %43 {offsets = [0, 15, 0], sizes = [1, 1, 128], strides = [1, 1, 1]} : vector<1x32x128xf32> to vector<1x1x128xf32>
    %150 = vector.extract_strided_slice %44 {offsets = [0, 0, 15], sizes = [1, 8, 1], strides = [1, 1, 1]} : vector<1x8x32xf32> to vector<1x8x1xf32>
    %151 = vector.broadcast %149 : vector<1x1x128xf32> to vector<1x8x128xf32>
    %152 = vector.broadcast %150 : vector<1x8x1xf32> to vector<1x8x128xf32>
    %153 = arith.subf %151, %152 : vector<1x8x128xf32>
    %154 = math.absf %153 : vector<1x8x128xf32>
    %155 = arith.addf %148, %154 : vector<1x8x128xf32>
    %156 = vector.extract_strided_slice %43 {offsets = [0, 16, 0], sizes = [1, 1, 128], strides = [1, 1, 1]} : vector<1x32x128xf32> to vector<1x1x128xf32>
    %157 = vector.extract_strided_slice %44 {offsets = [0, 0, 16], sizes = [1, 8, 1], strides = [1, 1, 1]} : vector<1x8x32xf32> to vector<1x8x1xf32>
    %158 = vector.broadcast %156 : vector<1x1x128xf32> to vector<1x8x128xf32>
    %159 = vector.broadcast %157 : vector<1x8x1xf32> to vector<1x8x128xf32>
    %160 = arith.subf %158, %159 : vector<1x8x128xf32>
    %161 = math.absf %160 : vector<1x8x128xf32>
    %162 = arith.addf %155, %161 : vector<1x8x128xf32>
    %163 = vector.extract_strided_slice %43 {offsets = [0, 17, 0], sizes = [1, 1, 128], strides = [1, 1, 1]} : vector<1x32x128xf32> to vector<1x1x128xf32>
    %164 = vector.extract_strided_slice %44 {offsets = [0, 0, 17], sizes = [1, 8, 1], strides = [1, 1, 1]} : vector<1x8x32xf32> to vector<1x8x1xf32>
    %165 = vector.broadcast %163 : vector<1x1x128xf32> to vector<1x8x128xf32>
    %166 = vector.broadcast %164 : vector<1x8x1xf32> to vector<1x8x128xf32>
    %167 = arith.subf %165, %166 : vector<1x8x128xf32>
    %168 = math.absf %167 : vector<1x8x128xf32>
    %169 = arith.addf %162, %168 : vector<1x8x128xf32>
    %170 = vector.extract_strided_slice %43 {offsets = [0, 18, 0], sizes = [1, 1, 128], strides = [1, 1, 1]} : vector<1x32x128xf32> to vector<1x1x128xf32>
    %171 = vector.extract_strided_slice %44 {offsets = [0, 0, 18], sizes = [1, 8, 1], strides = [1, 1, 1]} : vector<1x8x32xf32> to vector<1x8x1xf32>
    %172 = vector.broadcast %170 : vector<1x1x128xf32> to vector<1x8x128xf32>
    %173 = vector.broadcast %171 : vector<1x8x1xf32> to vector<1x8x128xf32>
    %174 = arith.subf %172, %173 : vector<1x8x128xf32>
    %175 = math.absf %174 : vector<1x8x128xf32>
    %176 = arith.addf %169, %175 : vector<1x8x128xf32>
    %177 = vector.extract_strided_slice %43 {offsets = [0, 19, 0], sizes = [1, 1, 128], strides = [1, 1, 1]} : vector<1x32x128xf32> to vector<1x1x128xf32>
    %178 = vector.extract_strided_slice %44 {offsets = [0, 0, 19], sizes = [1, 8, 1], strides = [1, 1, 1]} : vector<1x8x32xf32> to vector<1x8x1xf32>
    %179 = vector.broadcast %177 : vector<1x1x128xf32> to vector<1x8x128xf32>
    %180 = vector.broadcast %178 : vector<1x8x1xf32> to vector<1x8x128xf32>
    %181 = arith.subf %179, %180 : vector<1x8x128xf32>
    %182 = math.absf %181 : vector<1x8x128xf32>
    %183 = arith.addf %176, %182 : vector<1x8x128xf32>
    %184 = vector.extract_strided_slice %43 {offsets = [0, 20, 0], sizes = [1, 1, 128], strides = [1, 1, 1]} : vector<1x32x128xf32> to vector<1x1x128xf32>
    %185 = vector.extract_strided_slice %44 {offsets = [0, 0, 20], sizes = [1, 8, 1], strides = [1, 1, 1]} : vector<1x8x32xf32> to vector<1x8x1xf32>
    %186 = vector.broadcast %184 : vector<1x1x128xf32> to vector<1x8x128xf32>
    %187 = vector.broadcast %185 : vector<1x8x1xf32> to vector<1x8x128xf32>
    %188 = arith.subf %186, %187 : vector<1x8x128xf32>
    %189 = math.absf %188 : vector<1x8x128xf32>
    %190 = arith.addf %183, %189 : vector<1x8x128xf32>
    %191 = vector.extract_strided_slice %43 {offsets = [0, 21, 0], sizes = [1, 1, 128], strides = [1, 1, 1]} : vector<1x32x128xf32> to vector<1x1x128xf32>
    %192 = vector.extract_strided_slice %44 {offsets = [0, 0, 21], sizes = [1, 8, 1], strides = [1, 1, 1]} : vector<1x8x32xf32> to vector<1x8x1xf32>
    %193 = vector.broadcast %191 : vector<1x1x128xf32> to vector<1x8x128xf32>
    %194 = vector.broadcast %192 : vector<1x8x1xf32> to vector<1x8x128xf32>
    %195 = arith.subf %193, %194 : vector<1x8x128xf32>
    %196 = math.absf %195 : vector<1x8x128xf32>
    %197 = arith.addf %190, %196 : vector<1x8x128xf32>
    %198 = vector.extract_strided_slice %43 {offsets = [0, 22, 0], sizes = [1, 1, 128], strides = [1, 1, 1]} : vector<1x32x128xf32> to vector<1x1x128xf32>
    %199 = vector.extract_strided_slice %44 {offsets = [0, 0, 22], sizes = [1, 8, 1], strides = [1, 1, 1]} : vector<1x8x32xf32> to vector<1x8x1xf32>
    %200 = vector.broadcast %198 : vector<1x1x128xf32> to vector<1x8x128xf32>
    %201 = vector.broadcast %199 : vector<1x8x1xf32> to vector<1x8x128xf32>
    %202 = arith.subf %200, %201 : vector<1x8x128xf32>
    %203 = math.absf %202 : vector<1x8x128xf32>
    %204 = arith.addf %197, %203 : vector<1x8x128xf32>
    %205 = vector.extract_strided_slice %43 {offsets = [0, 23, 0], sizes = [1, 1, 128], strides = [1, 1, 1]} : vector<1x32x128xf32> to vector<1x1x128xf32>
    %206 = vector.extract_strided_slice %44 {offsets = [0, 0, 23], sizes = [1, 8, 1], strides = [1, 1, 1]} : vector<1x8x32xf32> to vector<1x8x1xf32>
    %207 = vector.broadcast %205 : vector<1x1x128xf32> to vector<1x8x128xf32>
    %208 = vector.broadcast %206 : vector<1x8x1xf32> to vector<1x8x128xf32>
    %209 = arith.subf %207, %208 : vector<1x8x128xf32>
    %210 = math.absf %209 : vector<1x8x128xf32>
    %211 = arith.addf %204, %210 : vector<1x8x128xf32>
    %212 = vector.extract_strided_slice %43 {offsets = [0, 24, 0], sizes = [1, 1, 128], strides = [1, 1, 1]} : vector<1x32x128xf32> to vector<1x1x128xf32>
    %213 = vector.extract_strided_slice %44 {offsets = [0, 0, 24], sizes = [1, 8, 1], strides = [1, 1, 1]} : vector<1x8x32xf32> to vector<1x8x1xf32>
    %214 = vector.broadcast %212 : vector<1x1x128xf32> to vector<1x8x128xf32>
    %215 = vector.broadcast %213 : vector<1x8x1xf32> to vector<1x8x128xf32>
    %216 = arith.subf %214, %215 : vector<1x8x128xf32>
    %217 = math.absf %216 : vector<1x8x128xf32>
    %218 = arith.addf %211, %217 : vector<1x8x128xf32>
    %219 = vector.extract_strided_slice %43 {offsets = [0, 25, 0], sizes = [1, 1, 128], strides = [1, 1, 1]} : vector<1x32x128xf32> to vector<1x1x128xf32>
    %220 = vector.extract_strided_slice %44 {offsets = [0, 0, 25], sizes = [1, 8, 1], strides = [1, 1, 1]} : vector<1x8x32xf32> to vector<1x8x1xf32>
    %221 = vector.broadcast %219 : vector<1x1x128xf32> to vector<1x8x128xf32>
    %222 = vector.broadcast %220 : vector<1x8x1xf32> to vector<1x8x128xf32>
    %223 = arith.subf %221, %222 : vector<1x8x128xf32>
    %224 = math.absf %223 : vector<1x8x128xf32>
    %225 = arith.addf %218, %224 : vector<1x8x128xf32>
    %226 = vector.extract_strided_slice %43 {offsets = [0, 26, 0], sizes = [1, 1, 128], strides = [1, 1, 1]} : vector<1x32x128xf32> to vector<1x1x128xf32>
    %227 = vector.extract_strided_slice %44 {offsets = [0, 0, 26], sizes = [1, 8, 1], strides = [1, 1, 1]} : vector<1x8x32xf32> to vector<1x8x1xf32>
    %228 = vector.broadcast %226 : vector<1x1x128xf32> to vector<1x8x128xf32>
    %229 = vector.broadcast %227 : vector<1x8x1xf32> to vector<1x8x128xf32>
    %230 = arith.subf %228, %229 : vector<1x8x128xf32>
    %231 = math.absf %230 : vector<1x8x128xf32>
    %232 = arith.addf %225, %231 : vector<1x8x128xf32>
    %233 = vector.extract_strided_slice %43 {offsets = [0, 27, 0], sizes = [1, 1, 128], strides = [1, 1, 1]} : vector<1x32x128xf32> to vector<1x1x128xf32>
    %234 = vector.extract_strided_slice %44 {offsets = [0, 0, 27], sizes = [1, 8, 1], strides = [1, 1, 1]} : vector<1x8x32xf32> to vector<1x8x1xf32>
    %235 = vector.broadcast %233 : vector<1x1x128xf32> to vector<1x8x128xf32>
    %236 = vector.broadcast %234 : vector<1x8x1xf32> to vector<1x8x128xf32>
    %237 = arith.subf %235, %236 : vector<1x8x128xf32>
    %238 = math.absf %237 : vector<1x8x128xf32>
    %239 = arith.addf %232, %238 : vector<1x8x128xf32>
    %240 = vector.extract_strided_slice %43 {offsets = [0, 28, 0], sizes = [1, 1, 128], strides = [1, 1, 1]} : vector<1x32x128xf32> to vector<1x1x128xf32>
    %241 = vector.extract_strided_slice %44 {offsets = [0, 0, 28], sizes = [1, 8, 1], strides = [1, 1, 1]} : vector<1x8x32xf32> to vector<1x8x1xf32>
    %242 = vector.broadcast %240 : vector<1x1x128xf32> to vector<1x8x128xf32>
    %243 = vector.broadcast %241 : vector<1x8x1xf32> to vector<1x8x128xf32>
    %244 = arith.subf %242, %243 : vector<1x8x128xf32>
    %245 = math.absf %244 : vector<1x8x128xf32>
    %246 = arith.addf %239, %245 : vector<1x8x128xf32>
    %247 = vector.extract_strided_slice %43 {offsets = [0, 29, 0], sizes = [1, 1, 128], strides = [1, 1, 1]} : vector<1x32x128xf32> to vector<1x1x128xf32>
    %248 = vector.extract_strided_slice %44 {offsets = [0, 0, 29], sizes = [1, 8, 1], strides = [1, 1, 1]} : vector<1x8x32xf32> to vector<1x8x1xf32>
    %249 = vector.broadcast %247 : vector<1x1x128xf32> to vector<1x8x128xf32>
    %250 = vector.broadcast %248 : vector<1x8x1xf32> to vector<1x8x128xf32>
    %251 = arith.subf %249, %250 : vector<1x8x128xf32>
    %252 = math.absf %251 : vector<1x8x128xf32>
    %253 = arith.addf %246, %252 : vector<1x8x128xf32>
    %254 = vector.extract_strided_slice %43 {offsets = [0, 30, 0], sizes = [1, 1, 128], strides = [1, 1, 1]} : vector<1x32x128xf32> to vector<1x1x128xf32>
    %255 = vector.extract_strided_slice %44 {offsets = [0, 0, 30], sizes = [1, 8, 1], strides = [1, 1, 1]} : vector<1x8x32xf32> to vector<1x8x1xf32>
    %256 = vector.broadcast %254 : vector<1x1x128xf32> to vector<1x8x128xf32>
    %257 = vector.broadcast %255 : vector<1x8x1xf32> to vector<1x8x128xf32>
    %258 = arith.subf %256, %257 : vector<1x8x128xf32>
    %259 = math.absf %258 : vector<1x8x128xf32>
    %260 = arith.addf %253, %259 : vector<1x8x128xf32>
    %261 = vector.extract_strided_slice %43 {offsets = [0, 31, 0], sizes = [1, 1, 128], strides = [1, 1, 1]} : vector<1x32x128xf32> to vector<1x1x128xf32>
    %262 = vector.extract_strided_slice %44 {offsets = [0, 0, 31], sizes = [1, 8, 1], strides = [1, 1, 1]} : vector<1x8x32xf32> to vector<1x8x1xf32>
    %263 = vector.broadcast %261 : vector<1x1x128xf32> to vector<1x8x128xf32>
    %264 = vector.broadcast %262 : vector<1x8x1xf32> to vector<1x8x128xf32>
    %265 = arith.subf %263, %264 : vector<1x8x128xf32>
    %266 = math.absf %265 : vector<1x8x128xf32>
    %267 = arith.addf %260, %266 : vector<1x8x128xf32>
    %cst = arith.constant 0.000000e+00 : f32
    %268 = vector.broadcast %cst : f32 to vector<1x8x128xf32>
    %269 = arith.subf %268, %267 : vector<1x8x128xf32>
    %270 = tpu.iota {dimensions = array<i32: 2>} : vector<1x1x128xi32>
    %c128_i32 = arith.constant 128 : i32
    %271 = arith.muli %arg2, %c128_i32 : i32
    %272 = vector.broadcast %271 : i32 to vector<1x1x128xi32>
    %273 = arith.addi %272, %270 : vector<1x1x128xi32>
    %c8_i32 = arith.constant 8 : i32
    %274 = vector.broadcast %c8_i32 : i32 to vector<1x1x128xi32>
    %275 = arith.cmpi slt, %273, %274 : vector<1x1x128xi32>
    %cst_8 = arith.constant -1.000000e+30 : f32
    %276 = vector.shape_cast %275 : vector<1x1x128xi1> to vector<1x1x128xi1>
    %277 = vector.broadcast %276 : vector<1x1x128xi1> to vector<1x8x128xi1>
    %278 = vector.broadcast %cst_8 : f32 to vector<1x8x128xf32>
    %279 = arith.select %277, %269, %278 : vector<1x8x128xi1>, vector<1x8x128xf32>
    %c0_9 = arith.constant 0 : index
    %c0_10 = arith.constant 0 : index
    %c0_11 = arith.constant 0 : index
    %280 = vector.load %arg10[%c0_9, %c0_10, %c0_11] : memref<1x8x1xf32, #tpu.memory_space<vmem>>, vector<1x8x1xf32>
    %cst_12 = arith.constant dense<0xFF800000> : vector<1x8xf32>
    %281 = vector.multi_reduction <maximumf>, %279, %cst_12 [2] : vector<1x8x128xf32> to vector<1x8xf32>
    %282 = vector.shape_cast %281 : vector<1x8xf32> to vector<1x8x1xf32>
    %283 = arith.maximumf %280, %282 : vector<1x8x1xf32>
    %284 = arith.subf %280, %283 : vector<1x8x1xf32>
    %285 = math.exp %284 : vector<1x8x1xf32>
    %286 = vector.broadcast %283 : vector<1x8x1xf32> to vector<1x8x128xf32>
    %287 = arith.subf %279, %286 : vector<1x8x128xf32>
    %288 = math.exp %287 : vector<1x8x128xf32>
    %c0_13 = arith.constant 0 : index
    %c0_14 = arith.constant 0 : index
    %c0_15 = arith.constant 0 : index
    %289 = vector.load %arg11[%c0_13, %c0_14, %c0_15] : memref<1x8x1xf32, #tpu.memory_space<vmem>>, vector<1x8x1xf32>
    %290 = arith.mulf %285, %289 : vector<1x8x1xf32>
    %cst_16 = arith.constant dense<0.000000e+00> : vector<1x8xf32>
    %291 = vector.multi_reduction <add>, %288, %cst_16 [2] : vector<1x8x128xf32> to vector<1x8xf32>
    %292 = vector.shape_cast %291 : vector<1x8xf32> to vector<1x8x1xf32>
    %293 = arith.addf %290, %292 : vector<1x8x1xf32>
    %c0_17 = arith.constant 0 : index
    %c0_18 = arith.constant 0 : index
    %c0_19 = arith.constant 0 : index
    %294 = vector.load %arg11[%c0_17, %c0_18, %c0_19] : memref<1x8x1xf32, #tpu.memory_space<vmem>>, vector<1x8x1xf32>
    tpu.vector_store %arg11[%c0_17, %c0_18, %c0_19], %293 {strides = array<i32>} : memref<1x8x1xf32, #tpu.memory_space<vmem>>, vector<1x8x1xf32>,
    %c0_20 = arith.constant 0 : index
    %c0_21 = arith.constant 0 : index
    %c0_22 = arith.constant 0 : index
    %295 = vector.load %arg12[%c0_20, %c0_21, %c0_22] : memref<1x8x32xf32, #tpu.memory_space<vmem>>, vector<1x8x32xf32>
    %296 = vector.broadcast %285 : vector<1x8x1xf32> to vector<1x8x32xf32>
    %297 = arith.mulf %296, %295 : vector<1x8x32xf32>
    %298 = arith.truncf %288 : vector<1x8x128xf32> to vector<1x8x128xbf16>
    %299 = arith.truncf %28 : vector<1x32x128xf32> to vector<1x32x128xbf16>
    "tpu.trace_start"() <{level = 10 : i32, message = "btc,bhc->bth"}> : () -> ()
    %cst_23 = arith.constant dense<0.000000e+00> : vector<1x8x32xf32>
    %300 = tpu.matmul %298, %299, %cst_23 {dimension_numbers = #tpu.dot_dimension_numbers<[2], [2], [1], [1], [0, 0, 0, 1, 1, 1], [0], [0]>} : vector<1x8x128xbf16>, vector<1x32x128xbf16>, vector<1x8x32xf32> -> vector<1x8x32xf32>
    "tpu.trace_stop"() : () -> ()
    %301 = arith.addf %297, %300 : vector<1x8x32xf32>
    %c0_24 = arith.constant 0 : index
    %c0_25 = arith.constant 0 : index
    %c0_26 = arith.constant 0 : index
    %302 = vector.load %arg12[%c0_24, %c0_25, %c0_26] : memref<1x8x32xf32, #tpu.memory_space<vmem>>, vector<1x8x32xf32>
    tpu.vector_store %arg12[%c0_24, %c0_25, %c0_26], %301 {strides = array<i32>} : memref<1x8x32xf32, #tpu.memory_space<vmem>>, vector<1x8x32xf32>,
    %c0_27 = arith.constant 0 : index
    %c0_28 = arith.constant 0 : index
    %c0_29 = arith.constant 0 : index
    %303 = vector.load %arg10[%c0_27, %c0_28, %c0_29] : memref<1x8x1xf32, #tpu.memory_space<vmem>>, vector<1x8x1xf32>
    tpu.vector_store %arg10[%c0_27, %c0_28, %c0_29], %283 {strides = array<i32>} : memref<1x8x1xf32, #tpu.memory_space<vmem>>, vector<1x8x1xf32>,
    %c0_i32_30 = arith.constant 0 : i32
    %304 = arith.cmpi eq, %arg2, %c0_i32_30 : i32
    %305 = arith.extui %304 : i1 to i32
    %c0_i32_31 = arith.constant 0 : i32
    %306 = arith.cmpi ne, %305, %c0_i32_31 : i32
    scf.if %306 {
      %c0_32 = arith.constant 0 : index
      %c0_33 = arith.constant 0 : index
      %c0_34 = arith.constant 0 : index
      %307 = vector.load %arg12[%c0_32, %c0_33, %c0_34] : memref<1x8x32xf32, #tpu.memory_space<vmem>>, vector<1x8x32xf32>
      %c0_35 = arith.constant 0 : index
      %c0_36 = arith.constant 0 : index
      %c0_37 = arith.constant 0 : index
      %308 = vector.load %arg11[%c0_35, %c0_36, %c0_37] : memref<1x8x1xf32, #tpu.memory_space<vmem>>, vector<1x8x1xf32>
      %309 = vector.broadcast %308 : vector<1x8x1xf32> to vector<1x8x32xf32>
      %310 = arith.divf %307, %309 : vector<1x8x32xf32>
      %311 = vector.shape_cast %310 : vector<1x8x32xf32> to vector<8x32xf32>
      %312 = arith.truncf %311 : vector<8x32xf32> to vector<8x32xbf16>
      %c0_38 = arith.constant 0 : index
      %c0_39 = arith.constant 0 : index
      %313 = vector.load %arg7[%c0_38, %c0_39] : memref<32x128xbf16, #tpu.memory_space<vmem>>, vector<32x128xbf16>
      %cst_40 = arith.constant dense<0.000000e+00> : vector<8x128xf32>
      %314 = tpu.matmul %312, %313, %cst_40 {dimension_numbers = #tpu.dot_dimension_numbers<[1], [0], [0], [1], [0, 0, 1, 1], [], []>} : vector<8x32xbf16>, vector<32x128xbf16>, vector<8x128xf32> -> vector<8x128xf32>
      %c0_41 = arith.constant 0 : index
      %c0_42 = arith.constant 0 : index
      %315 = vector.load %arg8[%c0_41, %c0_42] : memref<1x128xf32, #tpu.memory_space<vmem>>, vector<1x128xf32>
      %316 = vector.broadcast %315 : vector<1x128xf32> to vector<8x128xf32>
      %317 = arith.addf %314, %316 : vector<8x128xf32>
      %318 = vector.shape_cast %317 : vector<8x128xf32> to vector<1x8x128xf32>
      %c0_43 = arith.constant 0 : index
      %c0_44 = arith.constant 0 : index
      %c0_45 = arith.constant 0 : index
      %319 = vector.load %arg9[%c0_43, %c0_44, %c0_45] : memref<1x8x128xf32, #tpu.memory_space<vmem>>, vector<1x8x128xf32>
      tpu.vector_store %arg9[%c0_43, %c0_44, %c0_45], %318 {strides = array<i32>} : memref<1x8x128xf32, #tpu.memory_space<vmem>>, vector<1x8x128xf32>,
    } else {
    }
    return
  }
  func.func @transform_0(%arg0: i32, %arg1: i32, %arg2: i32) -> (i32, i32, i32) {
    %c0_i32 = arith.constant 0 : i32
    %c0_i32_0 = arith.constant 0 : i32
    return %arg0, %c0_i32, %arg2 : i32, i32, i32
  }
  func.func @transform_1(%arg0: i32, %arg1: i32, %arg2: i32) -> (i32, i32, i32) {
    %c0_i32 = arith.constant 0 : i32
    %c0_i32_0 = arith.constant 0 : i32
    return %arg0, %arg1, %c0_i32 : i32, i32, i32
  }
  func.func @transform_2(%arg0: i32, %arg1: i32, %arg2: i32) -> (i32, i32) {
    %c0_i32 = arith.constant 0 : i32
    %c0_i32_0 = arith.constant 0 : i32
    %c0_i32_1 = arith.constant 0 : i32
    return %c0_i32, %c0_i32_0 : i32, i32
  }
  func.func @transform_3(%arg0: i32, %arg1: i32, %arg2: i32) -> (i32, i32) {
    %c0_i32 = arith.constant 0 : i32
    %c0_i32_0 = arith.constant 0 : i32
    %c0_i32_1 = arith.constant 0 : i32
    return %c0_i32, %c0_i32_0 : i32, i32
  }
  func.func @transform_4(%arg0: i32, %arg1: i32, %arg2: i32) -> (i32, i32) {
    %c0_i32 = arith.constant 0 : i32
    %c0_i32_0 = arith.constant 0 : i32
    %c0_i32_1 = arith.constant 0 : i32
    return %c0_i32, %c0_i32_0 : i32, i32
  }
  func.func @transform_5(%arg0: i32, %arg1: i32, %arg2: i32) -> (i32, i32) {
    %c0_i32 = arith.constant 0 : i32
    %c0_i32_0 = arith.constant 0 : i32
    %c0_i32_1 = arith.constant 0 : i32
    return %c0_i32, %c0_i32_0 : i32, i32
  }
  func.func @transform_6(%arg0: i32, %arg1: i32, %arg2: i32) -> (i32, i32, i32) {
    %c0_i32 = arith.constant 0 : i32
    %c0_i32_0 = arith.constant 0 : i32
    return %arg0, %arg1, %c0_i32 : i32, i32, i32
  }
}

</mosaic_0001>

<llo_original>
// kernel: tpu_custom_call.1
$region0: #{tpu_custom_call.1}
  #allocation0 [shape = 'u32[]', space=smem, size = 0x4, offset = 0x4, fixed_abs, tag = 'smem constant byte address 0x4 - core index']
  #allocation1 [shape = 'u32[144,128]{1,0:T(1,128)}', space=vmem, size = 0x12000, scoped, tag = 'internal scratch']
  #allocation2 [shape = 'f32[1,8,1]{2,1,0:T(8,128)}', space=vmem, size = 0x1000, scoped, tag = 'scratch operand']
  #allocation3 [shape = 'f32[1,8,1]{2,1,0:T(8,128)}', space=vmem, size = 0x1000, scoped, tag = 'scratch operand']
  #allocation4 [shape = 'f32[1,8,32]{2,1,0:T(8,128)}', space=vmem, size = 0x1000, scoped, tag = 'scratch operand']
  #allocation5 [shape = 'f32[1,8,32]{2,1,0:T(8,128)}', space=vmem, size = 0x1000, scoped, tag = 'scratch operand']
  %s0 = inlined_call_operand.hbm [shape: f32[2,3,128], index: 0, kind: input, shape index: {}]
  %s1 = inlined_call_operand.hbm [shape: f32[2,8,2], index: 1, kind: input, shape index: {}]
  %s2 = inlined_call_operand.hbm [shape: f32[32,8], index: 2, kind: input, shape index: {}]
  %s3 = inlined_call_operand.hbm [shape: f32[8,32], index: 3, kind: input, shape index: {}]
  %s4 = inlined_call_operand.hbm [shape: bf16[32,128], index: 4, kind: input, shape index: {}]
  %s5 = inlined_call_operand.hbm [shape: f32[1,128], index: 5, kind: input, shape index: {}]
  %s6 = inlined_call_operand.hbm [shape: f32[2,8,128], index: 6, kind: output, shape index: {}]
  %s7 = sld [smem:[#allocation0]]
  $region89: #{tpu_custom_call.1} parent=0
    _
  %s9 = ssub.s32 1, %s7
  %s10 = scalar_select 0, %s9, %s7
  $region1: #{tpu_custom_call.1} parent=0
    #allocation6 [shape = 'u8[4096]{0}', space=vmem, size = 0x1000, scoped, tag = 'input window, operand 0']
    #allocation7 [shape = 's32[2]{0}', space=sflag, size = 0x8, scoped, tag = 'scoped memory for tpu_custom_call.1']
    #allocation8 [shape = 's32[2]{0}', space=sflag, size = 0x8, scoped, tag = 'scoped memory for tpu_custom_call.1']
    #allocation9 [shape = 'u8[8192]{0}', space=vmem, size = 0x2000, scoped, tag = 'input window, operand 1']
    #allocation10 [shape = 's32[2]{0}', space=sflag, size = 0x8, scoped, tag = 'scoped memory for tpu_custom_call.1']
    #allocation11 [shape = 'u8[16384]{0}', space=vmem, size = 0x4000, scoped, tag = 'input window, operand 2, single buffered']
    #allocation12 [shape = 'u8[4096]{0}', space=vmem, size = 0x1000, scoped, tag = 'input window, operand 3, single buffered']
    #allocation13 [shape = 's32[1]{0}', space=sflag, size = 0x4, scoped, tag = 'scoped memory for tpu_custom_call.1']
    #allocation14 [shape = 'u8[8192]{0}', space=vmem, size = 0x2000, scoped, tag = 'input window, operand 4, single buffered']
    #allocation15 [shape = 'u8[512]{0}', space=vmem, size = 0x400, scoped, tag = 'input window, operand 5, single buffered']
    #allocation16 [shape = 's32[1]{0}', space=sflag, size = 0x4, scoped, tag = 'scoped memory for tpu_custom_call.1']
    #allocation17 [shape = 'u8[8192]{0}', space=vmem, size = 0x2000, scoped, tag = 'output window, operand 0']
    %11 = vsyncpa [#allocation7], 0
    %s12 = scalar_lea.sflag [#allocation7], 1
    %13 = vsyncpa %s12, 0
    %14 = vsyncpa [#allocation10], 0
    %s15 = scalar_lea.sflag [#allocation10], 1
    %16 = vsyncpa %s15, 0
    %17 = vsyncpa [#allocation13], 0
    %18 = vsyncpa [#allocation16], 0
    %19 = vsyncpa [#allocation8], 0
    %s20 = scalar_lea.sflag [#allocation8], 1
    %21 = vsyncpa %s20, 0
    loop: start=0, step=1, limit=4
    $region2: #{tpu_custom_call.1} parent=1 // loop_pre_header
      _
    $region3: #{tpu_custom_call.1} parent=1 // loop_header
      %s23 = sphi 0, %s27
      %p24 = scmp.ge.s32.totalorder %s23, 4
      %s30 = sphi 0, %s49
      %s31 = sphi 0, %s45
      %s32 = sphi 0, %s41
      %s33 = sphi 0, %s30
      %s34 = sphi 0, %s31
      %s35 = sphi 0, %s32
      %s36 = sphi 0, %s33
      %s37 = sphi 0, %s34
      %s38 = sphi 0, %s35
      %s54 = sphi 0, %s56
      %s57 = sphi 0, %s54
      %s58 = sphi 0, %s57
      %s74 = sphi 0, %s58
      %s82 = sphi 0, %s84
      %s85 = sphi 0, %s82
      %s86 = sphi 0, %s85
      %s102 = sphi 0, %s86
      %s106 = sphi 0, %s106
      %s108 = sphi 0, %s106
      %s109 = sphi 0, %s108
      %s123 = sphi 0, %s109
      %s127 = sphi 0, %s127
      %s129 = sphi 0, %s127
      %s130 = sphi 0, %s129
      %s144 = sphi 0, %s130
      %s148 = sphi 0, %s148
      %s150 = sphi 0, %s148
      %s151 = sphi 0, %s150
      %s165 = sphi 0, %s151
      %s169 = sphi 0, %s169
      %s171 = sphi 0, %s169
      %s172 = sphi 0, %s171
      %s186 = sphi 0, %s172
      %s194 = sphi 0, %s196
      %s197 = sphi 0, %s194
      %s198 = sphi 0, %s197
      %s214 = sphi 0, %s198
    $region4: #{tpu_custom_call.1} parent=1 // loop_header_branch
      %26 = sbr.rel (%p24) target = $region8
    $region5: #{tpu_custom_call.1} parent=1 // loop_body
      %s28 = ssub.s32 %s23, 1
      %s29 = ssub.s32 %s23, 2
      %s39 = sadd.s32 1, %s32
      %p40 = scmp.ge.s32.totalorder %s39, 1
      %s41 = scalar_select %p40, 0, %s39
      %s42 = sadd.s32 1, %s31
      %s43 = scalar_select %p40, %s42, %s31
      %p44 = scmp.ge.s32.totalorder %s43, 1
      %s45 = scalar_select %p44, 0, %s43
      %s46 = sadd.s32 1, %s30
      %s47 = scalar_select %p44, %s46, %s30
      %p48 = scmp.ge.s32.totalorder %s47, 2
      %s49 = scalar_select %p48, 0, %s47
      %s50 = ssub.s32 %s30, %s49
      %s51 = ssub.s32 %s32, %s41
      %s52 = sor.u32 %s50, %s51
      %p53 = scmp.eq.s32.totalorder %s52, 0
      %s55 = sadd.s32 %s54, 1
      %s56 = scalar_select %p53, %s54, %s55
      %p59 = pneg %p53
      %p60 = scmp.eq.s32.totalorder %s23, 1
      %p61 = por %p59, %p60
      %p62 = scmp.ne.s32.totalorder %s54, %s57
      %p63 = scmp.eq.s32.totalorder %s23, 0
      %p64 = por %p62, %p63
      %p65 = scmp.ne.s32.totalorder %s54, %s57
      %p66 = scmp.eq.s32.totalorder %s28, 1
      %p67 = por %p65, %p66
      %p68 = scmp.ne.s32.totalorder %s57, %s58
      %p69 = scmp.eq.s32.totalorder %s28, 0
      %p70 = por %p68, %p69
      %p71 = scmp.ne.s32.totalorder %s57, %s58
      %p72 = scmp.eq.s32.totalorder %s29, 1
      %p73 = por %p71, %p72
      %p75 = scmp.ne.s32.totalorder %s58, %s74
      %p76 = scmp.eq.s32.totalorder %s29, 0
      %p77 = por %p75, %p76
      %s78 = ssub.s32 %s30, %s49
      %s79 = ssub.s32 %s31, %s45
      %s80 = sor.u32 %s78, %s79
      %p81 = scmp.eq.s32.totalorder %s80, 0
      %s83 = sadd.s32 %s82, 1
      %s84 = scalar_select %p81, %s82, %s83
      %p87 = pneg %p81
      %p88 = scmp.eq.s32.totalorder %s23, 1
      %p89 = por %p87, %p88
      %p90 = scmp.ne.s32.totalorder %s82, %s85
      %p91 = scmp.eq.s32.totalorder %s23, 0
      %p92 = por %p90, %p91
      %p93 = scmp.ne.s32.totalorder %s82, %s85
      %p94 = scmp.eq.s32.totalorder %s28, 1
      %p95 = por %p93, %p94
      %p96 = scmp.ne.s32.totalorder %s85, %s86
      %p97 = scmp.eq.s32.totalorder %s28, 0
      %p98 = por %p96, %p97
      %p99 = scmp.ne.s32.totalorder %s85, %s86
      %p100 = scmp.eq.s32.totalorder %s29, 1
      %p101 = por %p99, %p100
      %p103 = scmp.ne.s32.totalorder %s86, %s102
      %p104 = scmp.eq.s32.totalorder %s29, 0
      %p105 = por %p103, %p104
      %s107 = sadd.s32 %s106, 1
      %p110 = scmp.eq.s32.totalorder %s23, 1
      %p111 = scmp.ne.s32.totalorder %s106, %s108
      %p112 = scmp.eq.s32.totalorder %s23, 0
      %p113 = por %p111, %p112
      %p114 = scmp.ne.s32.totalorder %s106, %s108
      %p115 = scmp.eq.s32.totalorder %s28, 1
      %p116 = por %p114, %p115
      %p117 = scmp.ne.s32.totalorder %s108, %s109
      %p118 = scmp.eq.s32.totalorder %s28, 0
      %p119 = por %p117, %p118
      %p120 = scmp.ne.s32.totalorder %s108, %s109
      %p121 = scmp.eq.s32.totalorder %s29, 1
      %p122 = por %p120, %p121
      %p124 = scmp.ne.s32.totalorder %s109, %s123
      %p125 = scmp.eq.s32.totalorder %s29, 0
      %p126 = por %p124, %p125
      %s128 = sadd.s32 %s127, 1
      %p131 = scmp.eq.s32.totalorder %s23, 1
      %p132 = scmp.ne.s32.totalorder %s127, %s129
      %p133 = scmp.eq.s32.totalorder %s23, 0
      %p134 = por %p132, %p133
      %p135 = scmp.ne.s32.totalorder %s127, %s129
      %p136 = scmp.eq.s32.totalorder %s28, 1
      %p137 = por %p135, %p136
      %p138 = scmp.ne.s32.totalorder %s129, %s130
      %p139 = scmp.eq.s32.totalorder %s28, 0
      %p140 = por %p138, %p139
      %p141 = scmp.ne.s32.totalorder %s129, %s130
      %p142 = scmp.eq.s32.totalorder %s29, 1
      %p143 = por %p141, %p142
      %p145 = scmp.ne.s32.totalorder %s130, %s144
      %p146 = scmp.eq.s32.totalorder %s29, 0
      %p147 = por %p145, %p146
      %s149 = sadd.s32 %s148, 1
      %p152 = scmp.eq.s32.totalorder %s23, 1
      %p153 = scmp.ne.s32.totalorder %s148, %s150
      %p154 = scmp.eq.s32.totalorder %s23, 0
      %p155 = por %p153, %p154
      %p156 = scmp.ne.s32.totalorder %s148, %s150
      %p157 = scmp.eq.s32.totalorder %s28, 1
      %p158 = por %p156, %p157
      %p159 = scmp.ne.s32.totalorder %s150, %s151
      %p160 = scmp.eq.s32.totalorder %s28, 0
      %p161 = por %p159, %p160
      %p162 = scmp.ne.s32.totalorder %s150, %s151
      %p163 = scmp.eq.s32.totalorder %s29, 1
      %p164 = por %p162, %p163
      %p166 = scmp.ne.s32.totalorder %s151, %s165
      %p167 = scmp.eq.s32.totalorder %s29, 0
      %p168 = por %p166, %p167
      %s170 = sadd.s32 %s169, 1
      %p173 = scmp.eq.s32.totalorder %s23, 1
      %p174 = scmp.ne.s32.totalorder %s169, %s171
      %p175 = scmp.eq.s32.totalorder %s23, 0
      %p176 = por %p174, %p175
      %p177 = scmp.ne.s32.totalorder %s169, %s171
      %p178 = scmp.eq.s32.totalorder %s28, 1
      %p179 = por %p177, %p178
      %p180 = scmp.ne.s32.totalorder %s171, %s172
      %p181 = scmp.eq.s32.totalorder %s28, 0
      %p182 = por %p180, %p181
      %p183 = scmp.ne.s32.totalorder %s171, %s172
      %p184 = scmp.eq.s32.totalorder %s29, 1
      %p185 = por %p183, %p184
      %p187 = scmp.ne.s32.totalorder %s172, %s186
      %p188 = scmp.eq.s32.totalorder %s29, 0
      %p189 = por %p187, %p188
      %s190 = ssub.s32 %s30, %s49
      %s191 = ssub.s32 %s31, %s45
      %s192 = sor.u32 %s190, %s191
      %p193 = scmp.eq.s32.totalorder %s192, 0
      %s195 = sadd.s32 %s194, 1
      %s196 = scalar_select %p193, %s194, %s195
      %p199 = pneg %p193
      %p200 = scmp.eq.s32.totalorder %s23, 1
      %p201 = por %p199, %p200
      %p202 = scmp.ne.s32.totalorder %s194, %s197
      %p203 = scmp.eq.s32.totalorder %s23, 0
      %p204 = por %p202, %p203
      %p205 = scmp.ne.s32.totalorder %s194, %s197
      %p206 = scmp.eq.s32.totalorder %s28, 1
      %p207 = por %p205, %p206
      %p208 = scmp.ne.s32.totalorder %s197, %s198
      %p209 = scmp.eq.s32.totalorder %s28, 0
      %p210 = por %p208, %p209
      %p211 = scmp.ne.s32.totalorder %s197, %s198
      %p212 = scmp.eq.s32.totalorder %s29, 1
      %p213 = por %p211, %p212
      %p215 = scmp.ne.s32.totalorder %s198, %s214
      %p216 = scmp.eq.s32.totalorder %s29, 0
      %p217 = por %p215, %p216
      %p218 = scmp.le.s32.totalorder 1, %s23
      %p219 = scmp.lt.s32.totalorder %s23, 3
      %p220 = pnand %p218, %p219
      %p221 = pneg %p220
      // Predicated region
      $region9: #{tpu_custom_call.1} parent=5 // pred_check
        _
      $region10: #{tpu_custom_call.1} parent=5 // pred_check_branch
        %223 = sbr.rel (%p220) target = $region12
      $region11: #{tpu_custom_call.1} parent=5 // pred_region
        %s224 = ssub.s32 %s23, 1
        // Predicated region
        $region13: #{tpu_custom_call.1} parent=11 // pred_check
          %p225 = pneg %p119
        $region14: #{tpu_custom_call.1} parent=11 // pred_check_branch
          %227 = sbr.rel (%p225) target = $region16
        $region15: #{tpu_custom_call.1} parent=11 // pred_region
          %s229 = ssub.s32 512, 512
          %230 = vsyncadd [#allocation10], %s229
          %s231 = sshll.u32 [#allocation11], 4
          %s232 = int_to_ptr.vmem [resolvable:$true] %s231
          %237 = dma.hbm_to_vmem [thread:$0]  %s2, 512, %s232, [#allocation10], 128, 128, 8
        $region16: #{tpu_custom_call.1} parent=11 // pred_fallthru
          _
        // Predicated region
        $region17: #{tpu_custom_call.1} parent=11 // pred_check
          %p238 = pneg %p140
        $region18: #{tpu_custom_call.1} parent=11 // pred_check_branch
          %240 = sbr.rel (%p238) target = $region20
        $region19: #{tpu_custom_call.1} parent=11 // pred_region
          %s242 = ssub.s32 128, 128
          %243 = vsyncadd [#allocation13], %s242
          %s245 = sshll.u32 [#allocation12], 4
          %s246 = int_to_ptr.vmem [resolvable:$true] %s245
          %248 = dma.hbm_to_vmem [thread:$0]  %s3, 128, %s246, [#allocation13]
        $region20: #{tpu_custom_call.1} parent=11 // pred_fallthru
          _
        // Predicated region
        $region21: #{tpu_custom_call.1} parent=11 // pred_check
          %p249 = pneg %p161
        $region22: #{tpu_custom_call.1} parent=11 // pred_check_branch
          %251 = sbr.rel (%p249) target = $region24
        $region23: #{tpu_custom_call.1} parent=11 // pred_region
          %s253 = ssub.s32 256, 256
          %254 = vsyncadd [#allocation13], %s253
          %s255 = sshll.u32 [#allocation14], 4
          %s256 = int_to_ptr.vmem [resolvable:$true] %s255
          %261 = dma.hbm_to_vmem [thread:$0]  %s4, 256, %s256, [#allocation13], 64, 64, 4
        $region24: #{tpu_custom_call.1} parent=11 // pred_fallthru
          _
        // Predicated region
        $region25: #{tpu_custom_call.1} parent=11 // pred_check
          %p262 = pneg %p182
        $region26: #{tpu_custom_call.1} parent=11 // pred_check_branch
          %264 = sbr.rel (%p262) target = $region28
        $region27: #{tpu_custom_call.1} parent=11 // pred_region
          %s266 = ssub.s32 16, 16
          %267 = vsyncadd [#allocation16], %s266
          %s269 = sshll.u32 [#allocation15], 4
          %s270 = int_to_ptr.vmem [resolvable:$true] %s269
          %272 = dma.hbm_to_vmem [thread:$0]  %s5, 16, %s270, [#allocation16]
        $region28: #{tpu_custom_call.1} parent=11 // pred_fallthru
          _
      $region12: #{tpu_custom_call.1} parent=5 // pred_fallthru
        _
      %p273 = scmp.lt.s32.totalorder %s23, 2
      // Predicated region
      $region29: #{tpu_custom_call.1} parent=5 // pred_check
        %p274 = pneg %p273
      $region30: #{tpu_custom_call.1} parent=5 // pred_check_branch
        %276 = sbr.rel (%p274) target = $region32
      $region31: #{tpu_custom_call.1} parent=5 // pred_region
        // Predicated region
        $region33: #{tpu_custom_call.1} parent=31 // pred_check
          %p277 = pneg %p64
        $region34: #{tpu_custom_call.1} parent=31 // pred_check_branch
          %279 = sbr.rel (%p277) target = $region36
        $region35: #{tpu_custom_call.1} parent=31 // pred_region
          %s280 = sand.u32 %s54, 1
          %s281 = scalar_lea.sflag [#allocation7], %s280
          %s282 = sand.u32 %s54, 1
          %s283 = smul.addr %s282, 4
          %s284 = scalar_lea.vmem [#allocation6], %s283
          %s286 = ssub.s32 64, 64
          %287 = vsyncadd %s281, %s286
          %s288 = sadd.s32 %s32, %s30
          %s289 = smul.addr %s288, 64
          %s290 = scalar_lea.hbm %s0, %s289
          %s292 = sshll.u32 %s284, 4
          %s293 = int_to_ptr.vmem [resolvable:$true] %s292
          %295 = dma.hbm_to_vmem [thread:$0]  %s290, 64, %s293, %s281
        $region36: #{tpu_custom_call.1} parent=31 // pred_fallthru
          _
        // Predicated region
        $region37: #{tpu_custom_call.1} parent=31 // pred_check
          %p296 = pneg %p92
        $region38: #{tpu_custom_call.1} parent=31 // pred_check_branch
          %298 = sbr.rel (%p296) target = $region40
        $region39: #{tpu_custom_call.1} parent=31 // pred_region
          %s299 = sand.u32 %s23, 1
          %s300 = scalar_lea.sflag [#allocation10], %s299
          %s301 = sand.u32 %s82, 1
          %s302 = smul.addr %s301, 8
          %s303 = scalar_lea.vmem [#allocation9], %s302
          %s305 = ssub.s32 128, 128
          %306 = vsyncadd %s300, %s305
          %s307 = sadd.s32 %s31, %s30
          %s308 = smul.addr %s307, 128
          %s309 = scalar_lea.hbm %s1, %s308
          %s311 = sshll.u32 %s303, 4
          %s312 = int_to_ptr.vmem [resolvable:$true] %s311
          %314 = dma.hbm_to_vmem [thread:$0]  %s309, 128, %s312, %s300
        $region40: #{tpu_custom_call.1} parent=31 // pred_fallthru
          _
      $region32: #{tpu_custom_call.1} parent=5 // pred_fallthru
        _
      %p315 = scmp.le.s32.totalorder 1, %s23
      %p316 = scmp.lt.s32.totalorder %s23, 3
      %p317 = pnand %p315, %p316
      %p318 = pneg %p317
      // Predicated region
      $region41: #{tpu_custom_call.1} parent=5 // pred_check
        _
      $region42: #{tpu_custom_call.1} parent=5 // pred_check_branch
        %320 = sbr.rel (%p317) target = $region44
      $region43: #{tpu_custom_call.1} parent=5 // pred_region
        %s321 = ssub.s32 %s23, 1
        %s322 = sand.u32 %s57, 1
        %s323 = scalar_lea.sflag [#allocation7], %s322
        %s324 = sand.u32 %s57, 1
        %s325 = smul.addr %s324, 4
        %s326 = scalar_lea.vmem [#allocation6], %s325
        // Predicated region
        $region45: #{tpu_custom_call.1} parent=43 // pred_check
          %p327 = pneg %p70
        $region46: #{tpu_custom_call.1} parent=43 // pred_check_branch
          %329 = sbr.rel (%p327) target = $region48
        $region47: #{tpu_custom_call.1} parent=43 // pred_region
          %330 = dma.done %s323, 64
        $region48: #{tpu_custom_call.1} parent=43 // pred_fallthru
          _
        %s331 = sand.u32 %s28, 1
        %s332 = scalar_lea.sflag [#allocation10], %s331
        %s333 = sand.u32 %s85, 1
        %s334 = smul.addr %s333, 8
        %s335 = scalar_lea.vmem [#allocation9], %s334
        // Predicated region
        $region49: #{tpu_custom_call.1} parent=43 // pred_check
          %p336 = pneg %p98
        $region50: #{tpu_custom_call.1} parent=43 // pred_check_branch
          %338 = sbr.rel (%p336) target = $region52
        $region51: #{tpu_custom_call.1} parent=43 // pred_region
          %339 = dma.done %s332, 128
        $region52: #{tpu_custom_call.1} parent=43 // pred_fallthru
          _
        // Predicated region
        $region53: #{tpu_custom_call.1} parent=43 // pred_check
          %p340 = pneg %p119
        $region54: #{tpu_custom_call.1} parent=43 // pred_check_branch
          %342 = sbr.rel (%p340) target = $region56
        $region55: #{tpu_custom_call.1} parent=43 // pred_region
          %343 = dma.done [#allocation10], 512
        $region56: #{tpu_custom_call.1} parent=43 // pred_fallthru
          _
        // Predicated region
        $region57: #{tpu_custom_call.1} parent=43 // pred_check
          %p344 = pneg %p140
        $region58: #{tpu_custom_call.1} parent=43 // pred_check_branch
          %346 = sbr.rel (%p344) target = $region60
        $region59: #{tpu_custom_call.1} parent=43 // pred_region
          %347 = dma.done [#allocation13], 128
        $region60: #{tpu_custom_call.1} parent=43 // pred_fallthru
          _
        // Predicated region
        $region61: #{tpu_custom_call.1} parent=43 // pred_check
          %p348 = pneg %p161
        $region62: #{tpu_custom_call.1} parent=43 // pred_check_branch
          %350 = sbr.rel (%p348) target = $region64
        $region63: #{tpu_custom_call.1} parent=43 // pred_region
          %351 = dma.done [#allocation13], 256
        $region64: #{tpu_custom_call.1} parent=43 // pred_fallthru
          _
        // Predicated region
        $region65: #{tpu_custom_call.1} parent=43 // pred_check
          %p352 = pneg %p182
        $region66: #{tpu_custom_call.1} parent=43 // pred_check_branch
          %354 = sbr.rel (%p352) target = $region68
        $region67: #{tpu_custom_call.1} parent=43 // pred_region
          %355 = dma.done [#allocation16], 16
        $region68: #{tpu_custom_call.1} parent=43 // pred_fallthru
          _
        %s356 = sand.u32 %s57, 1
        %s357 = scalar_lea.sflag [#allocation7], %s356
        %s358 = sand.u32 %s57, 1
        %s359 = smul.addr %s358, 4
        %s360 = scalar_lea.vmem [#allocation6], %s359
        %p361 = pneg %p70
        %p362 = pneg %p67
        %s363 = sand.u32 %s28, 1
        %s364 = scalar_lea.sflag [#allocation10], %s363
        %s365 = sand.u32 %s85, 1
        %s366 = smul.addr %s365, 8
        %s367 = scalar_lea.vmem [#allocation9], %s366
        %p368 = pneg %p98
        %p369 = pneg %p95
        %p370 = pneg %p119
        %p371 = pneg %p116
        %p372 = pneg %p140
        %p373 = pneg %p137
        %p374 = pneg %p161
        %p375 = pneg %p158
        %p376 = pneg %p182
        %p377 = pneg %p179
        %p378 = pneg %p210
        %p379 = pneg %p207
        %s380 = sand.u32 %s197, 1
        %s381 = scalar_lea.sflag [#allocation8], %s380
        %s382 = sand.u32 %s197, 1
        %s383 = smul.addr %s382, 8
        %s384 = scalar_lea.vmem [#allocation17], %s383
        %p386 = scmp.eq.s32.totalorder %s35, 0
        // Predicated region
        $region69: #{tpu_custom_call.1} parent=43 // pred_check
          %p387 = pneg %p386
        $region70: #{tpu_custom_call.1} parent=43 // pred_check_branch
          %389 = sbr.rel (%p387) target = $region72
        $region71: #{tpu_custom_call.1} parent=43 // pred_region
          %vm390 = vcmask 7168
          %391 = vst.msk [vmem:[#allocation2] sm:$0xff] %vm390, -inf
          %392 = vst.msk [vmem:[#allocation3] sm:$0xff] %vm390, 0.0
          %vm393 = vcmask 261120
          %394 = vst.msk [vmem:[#allocation4] sm:$0xff] %vm393, 0.0
          %v395 = vld [vmem:[%s335] sm:$0xff]
          %v396 = vld [vmem:[#allocation12] sm:$0xff]
          %398 = vset.pattern.permute.xlu0 0
          %399 = vperm.xlu0 %398, %v395
          %v400 = vpop.permute.xlu0 %399
          %v402 = vlaneseq
          %v403 = vshrl.u32 %v402, 7
          %v404 = vsub.s32 0, %v403
          %v405 = vrot.slane %v396, %v404
          %v406 = vmul.f32 %v400, %v405
          %407 = vset.pattern.permute.xlu0 1
          %408 = vperm.xlu0 %407, %v395
          %v409 = vpop.permute.xlu0 %408
          %v411 = vlaneseq
          %v412 = vshrl.u32 %v411, 7
          %v413 = vsub.s32 1, %v412
          %v414 = vrot.slane %v396, %v413
          %v415 = vmul.f32 %v409, %v414
          %v416 = vadd.f32 %v406, %v415
          %v417 = vlaneseq
          %v418 = vshrl.u32 %v417, 7
          %v419 = vsub.s32 2, %v418
          %v420 = vrot.slane %v396, %v419
          %v421 = vadd.f32 %v416, %v420
          %422 = vst.msk [vmem:[#allocation5] sm:$0xff] %vm393, %v421
        $region72: #{tpu_custom_call.1} parent=43 // pred_fallthru
          _
        %v423 = vld [vmem:[%s326] sm:$0x7]
        %v424 = vld [vmem:[#allocation11] sm:$0xff]
        %v425 = vld [vmem:[#allocation11 + $0x8] sm:$0xff]
        %v426 = vld [vmem:[#allocation11 + $0x10] sm:$0xff]
        %v427 = vld [vmem:[#allocation11 + $0x18] sm:$0xff]
        %429 = vset.pattern.permute.xlu0 0
        %430 = vperm.xlu0 %429, %v424
        %v431 = vpop.permute.xlu0 %430
        %434 = vset.pattern.permute.xlu0 0
        %435 = vperm.xlu0 %434, %v425
        %v436 = vpop.permute.xlu0 %435
        %439 = vset.pattern.permute.xlu0 0
        %440 = vperm.xlu0 %439, %v426
        %v441 = vpop.permute.xlu0 %440
        %444 = vset.pattern.permute.xlu0 0
        %445 = vperm.xlu0 %444, %v427
        %v446 = vpop.permute.xlu0 %445
        %v448 = vlaneseq
        %v449 = vshrl.u32 %v448, 7
        %v450 = vsub.s32 0, %v449
        %v451 = vrot.slane %v423, %v450
        %v452 = vmul.f32 %v431, %v451
        %v453 = vmul.f32 %v436, %v451
        %v454 = vmul.f32 %v441, %v451
        %v455 = vmul.f32 %v446, %v451
        %456 = vset.pattern.permute.xlu0 1
        %457 = vperm.xlu0 %456, %v424
        %v458 = vpop.permute.xlu0 %457
        %460 = vset.pattern.permute.xlu0 1
        %461 = vperm.xlu0 %460, %v425
        %v462 = vpop.permute.xlu0 %461
        %464 = vset.pattern.permute.xlu0 1
        %465 = vperm.xlu0 %464, %v426
        %v466 = vpop.permute.xlu0 %465
        %468 = vset.pattern.permute.xlu0 1
        %469 = vperm.xlu0 %468, %v427
        %v470 = vpop.permute.xlu0 %469
        %v472 = vlaneseq
        %v473 = vshrl.u32 %v472, 7
        %v474 = vsub.s32 1, %v473
        %v475 = vrot.slane %v423, %v474
        %v476 = vmul.f32 %v458, %v475
        %v477 = vmul.f32 %v462, %v475
        %v478 = vmul.f32 %v466, %v475
        %v479 = vmul.f32 %v470, %v475
        %v480 = vadd.f32 %v452, %v476
        %v481 = vadd.f32 %v453, %v477
        %v482 = vadd.f32 %v454, %v478
        %v483 = vadd.f32 %v455, %v479
        %484 = vset.pattern.permute.xlu0 2
        %485 = vperm.xlu0 %484, %v424
        %v486 = vpop.permute.xlu0 %485
        %488 = vset.pattern.permute.xlu0 2
        %489 = vperm.xlu0 %488, %v425
        %v490 = vpop.permute.xlu0 %489
        %492 = vset.pattern.permute.xlu0 2
        %493 = vperm.xlu0 %492, %v426
        %v494 = vpop.permute.xlu0 %493
        %496 = vset.pattern.permute.xlu0 2
        %497 = vperm.xlu0 %496, %v427
        %v498 = vpop.permute.xlu0 %497
        %v500 = vlaneseq
        %v501 = vshrl.u32 %v500, 7
        %v502 = vsub.s32 2, %v501
        %v503 = vrot.slane %v423, %v502
        %v504 = vmul.f32 %v486, %v503
        %v505 = vmul.f32 %v490, %v503
        %v506 = vmul.f32 %v494, %v503
        %v507 = vmul.f32 %v498, %v503
        %v508 = vadd.f32 %v480, %v504
        %v509 = vadd.f32 %v481, %v505
        %v510 = vadd.f32 %v482, %v506
        %v511 = vadd.f32 %v483, %v507
        %512 = vset.pattern.permute.xlu0 3
        %513 = vperm.xlu0 %512, %v424
        %v514 = vpop.permute.xlu0 %513
        %516 = vset.pattern.permute.xlu0 3
        %517 = vperm.xlu0 %516, %v425
        %v518 = vpop.permute.xlu0 %517
        %520 = vset.pattern.permute.xlu0 3
        %521 = vperm.xlu0 %520, %v426
        %v522 = vpop.permute.xlu0 %521
        %524 = vset.pattern.permute.xlu0 3
        %525 = vperm.xlu0 %524, %v427
        %v526 = vpop.permute.xlu0 %525
        %v528 = vadd.f32 %v508, %v514
        %v529 = vadd.f32 %v509, %v518
        %v530 = vadd.f32 %v510, %v522
        %v531 = vadd.f32 %v511, %v526
        %532 = vset.pattern.permute.xlu0 4
        %533 = vperm.xlu0 %532, %v424
        %v534 = vpop.permute.xlu0 %533
        %536 = vset.pattern.permute.xlu0 4
        %537 = vperm.xlu0 %536, %v425
        %v538 = vpop.permute.xlu0 %537
        %540 = vset.pattern.permute.xlu0 4
        %541 = vperm.xlu0 %540, %v426
        %v542 = vpop.permute.xlu0 %541
        %544 = vset.pattern.permute.xlu0 4
        %545 = vperm.xlu0 %544, %v427
        %v546 = vpop.permute.xlu0 %545
        %v548 = vmul.f32 %v534, %v451
        %v549 = vmul.f32 %v538, %v451
        %v550 = vmul.f32 %v542, %v451
        %v551 = vmul.f32 %v546, %v451
        %552 = vset.pattern.permute.xlu0 5
        %553 = vperm.xlu0 %552, %v424
        %v554 = vpop.permute.xlu0 %553
        %556 = vset.pattern.permute.xlu0 5
        %557 = vperm.xlu0 %556, %v425
        %v558 = vpop.permute.xlu0 %557
        %560 = vset.pattern.permute.xlu0 5
        %561 = vperm.xlu0 %560, %v426
        %v562 = vpop.permute.xlu0 %561
        %564 = vset.pattern.permute.xlu0 5
        %565 = vperm.xlu0 %564, %v427
        %v566 = vpop.permute.xlu0 %565
        %v568 = vmul.f32 %v554, %v475
        %v569 = vmul.f32 %v558, %v475
        %v570 = vmul.f32 %v562, %v475
        %v571 = vmul.f32 %v566, %v475
        %v572 = vadd.f32 %v548, %v568
        %v573 = vadd.f32 %v549, %v569
        %v574 = vadd.f32 %v550, %v570
        %v575 = vadd.f32 %v551, %v571
        %576 = vset.pattern.permute.xlu0 6
        %577 = vperm.xlu0 %576, %v424
        %v578 = vpop.permute.xlu0 %577
        %580 = vset.pattern.permute.xlu0 6
        %581 = vperm.xlu0 %580, %v425
        %v582 = vpop.permute.xlu0 %581
        %584 = vset.pattern.permute.xlu0 6
        %585 = vperm.xlu0 %584, %v426
        %v586 = vpop.permute.xlu0 %585
        %588 = vset.pattern.permute.xlu0 6
        %589 = vperm.xlu0 %588, %v427
        %v590 = vpop.permute.xlu0 %589
        %v592 = vadd.f32 %v572, %v578
        %v593 = vadd.f32 %v573, %v582
        %v594 = vadd.f32 %v574, %v586
        %v595 = vadd.f32 %v575, %v590
        %v596 = vld [vmem:[#allocation5] sm:$0xff]
        %v597 = vlaneseq
        %v598 = vshrl.u32 %v597, 7
        %v599 = vsub.s32 0, %v598
        %v600 = vrot.slane %v592, %v599
        %602 = vset.pattern.permute.xlu0 0
        %603 = vperm.xlu0 %602, %v596
        %v604 = vpop.permute.xlu0 %603
        %v606 = vsub.f32 %v600, %v604
        %v607 = vand.u32 2147483647, %v606
        %v608 = vlaneseq
        %v609 = vshrl.u32 %v608, 7
        %v610 = vsub.s32 1, %v609
        %v611 = vrot.slane %v592, %v610
        %612 = vset.pattern.permute.xlu0 1
        %613 = vperm.xlu0 %612, %v596
        %v614 = vpop.permute.xlu0 %613
        %v616 = vsub.f32 %v611, %v614
        %v617 = vand.u32 2147483647, %v616
        %v618 = vadd.f32 %v607, %v617
        %v619 = vlaneseq
        %v620 = vshrl.u32 %v619, 7
        %v621 = vsub.s32 2, %v620
        %v622 = vrot.slane %v592, %v621
        %623 = vset.pattern.permute.xlu0 2
        %624 = vperm.xlu0 %623, %v596
        %v625 = vpop.permute.xlu0 %624
        %v627 = vsub.f32 %v622, %v625
        %v628 = vand.u32 2147483647, %v627
        %v629 = vadd.f32 %v618, %v628
        %v630 = vlaneseq
        %v631 = vshrl.u32 %v630, 7
        %v632 = vsub.s32 3, %v631
        %v633 = vrot.slane %v592, %v632
        %634 = vset.pattern.permute.xlu0 3
        %635 = vperm.xlu0 %634, %v596
        %v636 = vpop.permute.xlu0 %635
        %v638 = vsub.f32 %v633, %v636
        %v639 = vand.u32 2147483647, %v638
        %v640 = vadd.f32 %v629, %v639
        %v641 = vlaneseq
        %v642 = vshrl.u32 %v641, 7
        %v643 = vsub.s32 4, %v642
        %v644 = vrot.slane %v592, %v643
        %645 = vset.pattern.permute.xlu0 4
        %646 = vperm.xlu0 %645, %v596
        %v647 = vpop.permute.xlu0 %646
        %v649 = vsub.f32 %v644, %v647
        %v650 = vand.u32 2147483647, %v649
        %v651 = vadd.f32 %v640, %v650
        %v652 = vlaneseq
        %v653 = vshrl.u32 %v652, 7
        %v654 = vsub.s32 5, %v653
        %v655 = vrot.slane %v592, %v654
        %656 = vset.pattern.permute.xlu0 5
        %657 = vperm.xlu0 %656, %v596
        %v658 = vpop.permute.xlu0 %657
        %v660 = vsub.f32 %v655, %v658
        %v661 = vand.u32 2147483647, %v660
        %v662 = vadd.f32 %v651, %v661
        %v663 = vlaneseq
        %v664 = vshrl.u32 %v663, 7
        %v665 = vsub.s32 6, %v664
        %v666 = vrot.slane %v592, %v665
        %667 = vset.pattern.permute.xlu0 6
        %668 = vperm.xlu0 %667, %v596
        %v669 = vpop.permute.xlu0 %668
        %v671 = vsub.f32 %v666, %v669
        %v672 = vand.u32 2147483647, %v671
        %v673 = vadd.f32 %v662, %v672
        %v674 = vlaneseq
        %v675 = vshrl.u32 %v674, 7
        %v676 = vsub.s32 7, %v675
        %v677 = vrot.slane %v592, %v676
        %678 = vset.pattern.permute.xlu0 7
        %679 = vperm.xlu0 %678, %v596
        %v680 = vpop.permute.xlu0 %679
        %v682 = vsub.f32 %v677, %v680
        %v683 = vand.u32 2147483647, %v682
        %v684 = vadd.f32 %v673, %v683
        %v685 = vlaneseq
        %v686 = vshrl.u32 %v685, 7
        %v687 = vsub.s32 0, %v686
        %v688 = vrot.slane %v593, %v687
        %689 = vset.pattern.permute.xlu0 8
        %690 = vperm.xlu0 %689, %v596
        %v691 = vpop.permute.xlu0 %690
        %v693 = vsub.f32 %v688, %v691
        %v694 = vand.u32 2147483647, %v693
        %v695 = vadd.f32 %v684, %v694
        %v696 = vlaneseq
        %v697 = vshrl.u32 %v696, 7
        %v698 = vsub.s32 1, %v697
        %v699 = vrot.slane %v593, %v698
        %700 = vset.pattern.permute.xlu0 9
        %701 = vperm.xlu0 %700, %v596
        %v702 = vpop.permute.xlu0 %701
        %v704 = vsub.f32 %v699, %v702
        %v705 = vand.u32 2147483647, %v704
        %v706 = vadd.f32 %v695, %v705
        %v707 = vlaneseq
        %v708 = vshrl.u32 %v707, 7
        %v709 = vsub.s32 2, %v708
        %v710 = vrot.slane %v593, %v709
        %711 = vset.pattern.permute.xlu0 10
        %712 = vperm.xlu0 %711, %v596
        %v713 = vpop.permute.xlu0 %712
        %v715 = vsub.f32 %v710, %v713
        %v716 = vand.u32 2147483647, %v715
        %v717 = vadd.f32 %v706, %v716
        %v718 = vlaneseq
        %v719 = vshrl.u32 %v718, 7
        %v720 = vsub.s32 3, %v719
        %v721 = vrot.slane %v593, %v720
        %722 = vset.pattern.permute.xlu0 11
        %723 = vperm.xlu0 %722, %v596
        %v724 = vpop.permute.xlu0 %723
        %v726 = vsub.f32 %v721, %v724
        %v727 = vand.u32 2147483647, %v726
        %v728 = vadd.f32 %v717, %v727
        %v729 = vlaneseq
        %v730 = vshrl.u32 %v729, 7
        %v731 = vsub.s32 4, %v730
        %v732 = vrot.slane %v593, %v731
        %733 = vset.pattern.permute.xlu0 12
        %734 = vperm.xlu0 %733, %v596
        %v735 = vpop.permute.xlu0 %734
        %v737 = vsub.f32 %v732, %v735
        %v738 = vand.u32 2147483647, %v737
        %v739 = vadd.f32 %v728, %v738
        %v740 = vlaneseq
        %v741 = vshrl.u32 %v740, 7
        %v742 = vsub.s32 5, %v741
        %v743 = vrot.slane %v593, %v742
        %744 = vset.pattern.permute.xlu0 13
        %745 = vperm.xlu0 %744, %v596
        %v746 = vpop.permute.xlu0 %745
        %v748 = vsub.f32 %v743, %v746
        %v749 = vand.u32 2147483647, %v748
        %v750 = vadd.f32 %v739, %v749
        %v751 = vlaneseq
        %v752 = vshrl.u32 %v751, 7
        %v753 = vsub.s32 6, %v752
        %v754 = vrot.slane %v593, %v753
        %755 = vset.pattern.permute.xlu0 14
        %756 = vperm.xlu0 %755, %v596
        %v757 = vpop.permute.xlu0 %756
        %v759 = vsub.f32 %v754, %v757
        %v760 = vand.u32 2147483647, %v759
        %v761 = vadd.f32 %v750, %v760
        %v762 = vlaneseq
        %v763 = vshrl.u32 %v762, 7
        %v764 = vsub.s32 7, %v763
        %v765 = vrot.slane %v593, %v764
        %766 = vset.pattern.permute.xlu0 15
        %767 = vperm.xlu0 %766, %v596
        %v768 = vpop.permute.xlu0 %767
        %v770 = vsub.f32 %v765, %v768
        %v771 = vand.u32 2147483647, %v770
        %v772 = vadd.f32 %v761, %v771
        %v773 = vlaneseq
        %v774 = vshrl.u32 %v773, 7
        %v775 = vsub.s32 0, %v774
        %v776 = vrot.slane %v594, %v775
        %777 = vset.pattern.permute.xlu0 16
        %778 = vperm.xlu0 %777, %v596
        %v779 = vpop.permute.xlu0 %778
        %v781 = vsub.f32 %v776, %v779
        %v782 = vand.u32 2147483647, %v781
        %v783 = vadd.f32 %v772, %v782
        %v784 = vlaneseq
        %v785 = vshrl.u32 %v784, 7
        %v786 = vsub.s32 1, %v785
        %v787 = vrot.slane %v594, %v786
        %788 = vset.pattern.permute.xlu0 17
        %789 = vperm.xlu0 %788, %v596
        %v790 = vpop.permute.xlu0 %789
        %v792 = vsub.f32 %v787, %v790
        %v793 = vand.u32 2147483647, %v792
        %v794 = vadd.f32 %v783, %v793
        %v795 = vlaneseq
        %v796 = vshrl.u32 %v795, 7
        %v797 = vsub.s32 2, %v796
        %v798 = vrot.slane %v594, %v797
        %799 = vset.pattern.permute.xlu0 18
        %800 = vperm.xlu0 %799, %v596
        %v801 = vpop.permute.xlu0 %800
        %v803 = vsub.f32 %v798, %v801
        %v804 = vand.u32 2147483647, %v803
        %v805 = vadd.f32 %v794, %v804
        %v806 = vlaneseq
        %v807 = vshrl.u32 %v806, 7
        %v808 = vsub.s32 3, %v807
        %v809 = vrot.slane %v594, %v808
        %810 = vset.pattern.permute.xlu0 19
        %811 = vperm.xlu0 %810, %v596
        %v812 = vpop.permute.xlu0 %811
        %v814 = vsub.f32 %v809, %v812
        %v815 = vand.u32 2147483647, %v814
        %v816 = vadd.f32 %v805, %v815
        %v817 = vlaneseq
        %v818 = vshrl.u32 %v817, 7
        %v819 = vsub.s32 4, %v818
        %v820 = vrot.slane %v594, %v819
        %821 = vset.pattern.permute.xlu0 20
        %822 = vperm.xlu0 %821, %v596
        %v823 = vpop.permute.xlu0 %822
        %v825 = vsub.f32 %v820, %v823
        %v826 = vand.u32 2147483647, %v825
        %v827 = vadd.f32 %v816, %v826
        %v828 = vlaneseq
        %v829 = vshrl.u32 %v828, 7
        %v830 = vsub.s32 5, %v829
        %v831 = vrot.slane %v594, %v830
        %832 = vset.pattern.permute.xlu0 21
        %833 = vperm.xlu0 %832, %v596
        %v834 = vpop.permute.xlu0 %833
        %v836 = vsub.f32 %v831, %v834
        %v837 = vand.u32 2147483647, %v836
        %v838 = vadd.f32 %v827, %v837
        %v839 = vlaneseq
        %v840 = vshrl.u32 %v839, 7
        %v841 = vsub.s32 6, %v840
        %v842 = vrot.slane %v594, %v841
        %843 = vset.pattern.permute.xlu0 22
        %844 = vperm.xlu0 %843, %v596
        %v845 = vpop.permute.xlu0 %844
        %v847 = vsub.f32 %v842, %v845
        %v848 = vand.u32 2147483647, %v847
        %v849 = vadd.f32 %v838, %v848
        %v850 = vlaneseq
        %v851 = vshrl.u32 %v850, 7
        %v852 = vsub.s32 7, %v851
        %v853 = vrot.slane %v594, %v852
        %854 = vset.pattern.permute.xlu0 23
        %855 = vperm.xlu0 %854, %v596
        %v856 = vpop.permute.xlu0 %855
        %v858 = vsub.f32 %v853, %v856
        %v859 = vand.u32 2147483647, %v858
        %v860 = vadd.f32 %v849, %v859
        %v861 = vlaneseq
        %v862 = vshrl.u32 %v861, 7
        %v863 = vsub.s32 0, %v862
        %v864 = vrot.slane %v595, %v863
        %865 = vset.pattern.permute.xlu0 24
        %866 = vperm.xlu0 %865, %v596
        %v867 = vpop.permute.xlu0 %866
        %v869 = vsub.f32 %v864, %v867
        %v870 = vand.u32 2147483647, %v869
        %v871 = vadd.f32 %v860, %v870
        %v872 = vlaneseq
        %v873 = vshrl.u32 %v872, 7
        %v874 = vsub.s32 1, %v873
        %v875 = vrot.slane %v595, %v874
        %876 = vset.pattern.permute.xlu0 25
        %877 = vperm.xlu0 %876, %v596
        %v878 = vpop.permute.xlu0 %877
        %v880 = vsub.f32 %v875, %v878
        %v881 = vand.u32 2147483647, %v880
        %v882 = vadd.f32 %v871, %v881
        %v883 = vlaneseq
        %v884 = vshrl.u32 %v883, 7
        %v885 = vsub.s32 2, %v884
        %v886 = vrot.slane %v595, %v885
        %887 = vset.pattern.permute.xlu0 26
        %888 = vperm.xlu0 %887, %v596
        %v889 = vpop.permute.xlu0 %888
        %v891 = vsub.f32 %v886, %v889
        %v892 = vand.u32 2147483647, %v891
        %v893 = vadd.f32 %v882, %v892
        %v894 = vlaneseq
        %v895 = vshrl.u32 %v894, 7
        %v896 = vsub.s32 3, %v895
        %v897 = vrot.slane %v595, %v896
        %898 = vset.pattern.permute.xlu0 27
        %899 = vperm.xlu0 %898, %v596
        %v900 = vpop.permute.xlu0 %899
        %v902 = vsub.f32 %v897, %v900
        %v903 = vand.u32 2147483647, %v902
        %v904 = vadd.f32 %v893, %v903
        %v905 = vlaneseq
        %v906 = vshrl.u32 %v905, 7
        %v907 = vsub.s32 4, %v906
        %v908 = vrot.slane %v595, %v907
        %909 = vset.pattern.permute.xlu0 28
        %910 = vperm.xlu0 %909, %v596
        %v911 = vpop.permute.xlu0 %910
        %v913 = vsub.f32 %v908, %v911
        %v914 = vand.u32 2147483647, %v913
        %v915 = vadd.f32 %v904, %v914
        %v916 = vlaneseq
        %v917 = vshrl.u32 %v916, 7
        %v918 = vsub.s32 5, %v917
        %v919 = vrot.slane %v595, %v918
        %920 = vset.pattern.permute.xlu0 29
        %921 = vperm.xlu0 %920, %v596
        %v922 = vpop.permute.xlu0 %921
        %v924 = vsub.f32 %v919, %v922
        %v925 = vand.u32 2147483647, %v924
        %v926 = vadd.f32 %v915, %v925
        %v927 = vlaneseq
        %v928 = vshrl.u32 %v927, 7
        %v929 = vsub.s32 6, %v928
        %v930 = vrot.slane %v595, %v929
        %931 = vset.pattern.permute.xlu0 30
        %932 = vperm.xlu0 %931, %v596
        %v933 = vpop.permute.xlu0 %932
        %v935 = vsub.f32 %v930, %v933
        %v936 = vand.u32 2147483647, %v935
        %v937 = vadd.f32 %v926, %v936
        %v938 = vlaneseq
        %v939 = vshrl.u32 %v938, 7
        %v940 = vsub.s32 7, %v939
        %v941 = vrot.slane %v595, %v940
        %942 = vset.pattern.permute.xlu0 31
        %943 = vperm.xlu0 %942, %v596
        %v944 = vpop.permute.xlu0 %943
        %v946 = vsub.f32 %v941, %v944
        %v947 = vand.u32 2147483647, %v946
        %v948 = vadd.f32 %v937, %v947
        %v949 = vsub.f32 0.0, %v948
        %v950 = vlaneseq
        %v951 = vand.u32 %v950, 127
        %s952 = smul.u32 %s35, 128
        %v953 = vstv %s952
        %v954 = vadd.s32 %v953, %v951
        %vm955 = vcmp.lt.s32.totalorder %v954, 8
        %v956 = vsel %vm955, 1, 0
        %vm957 = vcmp.eq.s32.totalorder %v956, 1
        %v958 = vsel %vm957, %v949, -1e+30
        %v959 = vld [vmem:[#allocation2] sm:$0xff]
        %960 = vmax.xlane.f32.xlu0 %v958
        %v961 = vpop.xlane.xlu0 %960
        %v962 = vmax.f32 %v959, %v961
        %v963 = vsub.f32 %v959, %v962
        %v964 = vmul.f32 %v963, 1.442695
        %v965 = vpow.pop %v964
        %967 = vset.pattern.permute.xlu0 0
        %968 = vperm.xlu0 %967, %v962
        %v969 = vpop.permute.xlu0 %968
        %v971 = vsub.f32 %v958, %v969
        %v972 = vmul.f32 %v971, 1.442695
        %v973 = vpow.pop %v972
        %v974 = vld [vmem:[#allocation3] sm:$0xff]
        %v975 = vmul.f32 %v965, %v974
        %976 = vadd.xlane.f32.xlu0 %v973
        %v977 = vpop.xlane.xlu0 %976
        %v978 = vadd.f32 %v975, %v977
        %vm979 = vcmask 7168
        %980 = vst.msk [vmem:[#allocation3] sm:$0xff] %vm979, %v978
        %v981 = vld [vmem:[#allocation4] sm:$0xff]
        %983 = vset.pattern.permute.xlu0 0
        %984 = vperm.xlu0 %983, %v965
        %v985 = vpop.permute.xlu0 %984
        %v987 = vmul.f32 %v985, %v981
        %v988 = vpack.c.bf16 %v973, %v973
        %v989 = vpack.c.bf16 %v529, %v528
        %v990 = vpack.c.bf16 %v531, %v530
        %991 = vmatprep.subr.bf16.mxu0 0
        %992 = vmatpush1.bf16.xpose.msra.mxu0 %v989
        %993 = vmatprep.subr.bf16.mxu0 0
        %994 = vmatpush1.bf16.xpose.msra.mxu0 %v990
        %995 = vmatprep.subr.bf16.mxu0 0
        %996 = vmatpush1.bf16.xpose.msra.mxu0 0
        %997 = vmatprep.subr.bf16.mxu0 0
        %998 = vmatpush1.bf16.xpose.msra.mxu0 0
        %999 = vmatprep.subr.bf16.mxu0 0
        %1000 = vmatpush1.bf16.xpose.msra.mxu0 0
        %1001 = vmatprep.subr.bf16.mxu0 0
        %1002 = vmatpush1.bf16.xpose.msra.mxu0 0
        %1003 = vmatprep.subr.bf16.mxu0 0
        %1004 = vmatpush1.bf16.xpose.msra.mxu0 0
        %1005 = vmatprep.subr.bf16.mxu0 0
        %1006 = vmatpush1.bf16.xpose.msra.mxu0 0
        %1007 = vmatprep.subr.bf16.mxu0 0
        %1008 = vmatpush1.bf16.xpose.msra.mxu0 0
        %1009 = vmatprep.subr.bf16.mxu0 0
        %1010 = vmatpush1.bf16.xpose.msra.mxu0 0
        %1011 = vmatprep.subr.bf16.mxu0 0
        %1012 = vmatpush1.bf16.xpose.msra.mxu0 0
        %1013 = vmatprep.subr.bf16.mxu0 0
        %1014 = vmatpush1.bf16.xpose.msra.mxu0 0
        %1015 = vmatprep.subr.bf16.mxu0 0
        %1016 = vmatpush1.bf16.xpose.msra.mxu0 0
        %1017 = vmatprep.subr.bf16.mxu0 0
        %1018 = vmatpush1.bf16.xpose.msra.mxu0 0
        %1019 = vmatprep.subr.bf16.mxu0 0
        %1020 = vmatpush1.bf16.xpose.msra.mxu0 0
        %1021 = vmatprep.subr.bf16.mxu0 0
        %1022 = vmatpush1.bf16.xpose.msra.mxu0 0
        %1023 = vmatprep.mubr.bf16.mxu0 0
        %1024 = vmatmul.mubr.bf16.gmra.mrb[0].mxu0 %v988
        %v1025 = vpop.f32.mrb[0].mxu0
        %v1026 = vadd.f32 0.0, %v1025
        %v1027 = vpop.f32.mrb[0].mxu0
        %v1028 = vpop.f32.mrb[0].mxu0
        %v1029 = vpop.f32.mrb[0].mxu0
        %1030 = vdwg.mxu0
        %v1031 = vadd.f32 %v987, %v1026
        %vm1032 = vcmask 261120
        %1033 = vst.msk [vmem:[#allocation4] sm:$0xff] %vm1032, %v1031
        %1034 = vst.msk [vmem:[#allocation2] sm:$0xff] %vm979, %v962
        // Predicated region
        $region73: #{tpu_custom_call.1} parent=43 // pred_check
          %p1035 = pneg %p386
        $region74: #{tpu_custom_call.1} parent=43 // pred_check_branch
          %1037 = sbr.rel (%p1035) target = $region76
        $region75: #{tpu_custom_call.1} parent=43 // pred_region
          %v1038 = vld [vmem:[#allocation4] sm:$0xff]
          %v1039 = vld [vmem:[#allocation3] sm:$0xff]
          %1041 = vset.pattern.permute.xlu0 0
          %1042 = vperm.xlu0 %1041, %v1039
          %v1043 = vpop.permute.xlu0 %1042
          %v1045 = vrcp.pop %v1043
          %v1046 = vmul.f32 %v1038, %v1045
          %v1047 = vpack.c.bf16 %v1046, %v1046
          %v1048 = vld [vmem:[#allocation14] sm:$0xf]
          %v1049 = vld [vmem:[#allocation14 + $0x4] sm:$0xf]
          %v1050 = vld [vmem:[#allocation14 + $0x8] sm:$0xf]
          %v1051 = vld [vmem:[#allocation14 + $0xc] sm:$0xf]
          %v1052 = vld [vmem:[#allocation15] sm:$0x1]
          %v1054 = vlaneseq
          %v1055 = vshrl.u32 %v1054, 7
          %v1056 = vsub.s32 0, %v1055
          %v1057 = vrot.slane %v1052, %v1056
          %v1063 = vunpack.c.l.b16 %v1048
          %v1064 = vunpack.c.l.b16 %v1049
          %v1065 = vunpack.c.l.b16 %v1050
          %v1066 = vunpack.c.l.b16 %v1051
          %v1067 = vpack.c.b16 %v1064, %v1063
          %v1068 = vpack.c.b16 %v1066, %v1065
          %v1072 = vsel %vm1032, %v1047, 0
          %1074 = vmatprep.subr.bf16.mxu0 0
          %1075 = vmatpush1.bf16.msra.mxu0 %v1067
          %1076 = vmatprep.subr.bf16.mxu0 0
          %1077 = vmatpush1.bf16.msra.mxu0 %v1068
          %1078 = vmatprep.subr.bf16.mxu0 0
          %1079 = vmatpush1.bf16.msra.mxu0 0
          %1080 = vmatprep.subr.bf16.mxu0 0
          %1081 = vmatpush1.bf16.msra.mxu0 0
          %1082 = vmatprep.subr.bf16.mxu0 0
          %1083 = vmatpush1.bf16.msra.mxu0 0
          %1084 = vmatprep.subr.bf16.mxu0 0
          %1085 = vmatpush1.bf16.msra.mxu0 0
          %1086 = vmatprep.subr.bf16.mxu0 0
          %1087 = vmatpush1.bf16.msra.mxu0 0
          %1088 = vmatprep.subr.bf16.mxu0 0
          %1089 = vmatpush1.bf16.msra.mxu0 0
          %1090 = vmatprep.subr.bf16.mxu0 0
          %1091 = vmatpush1.bf16.msra.mxu0 0
          %1092 = vmatprep.subr.bf16.mxu0 0
          %1093 = vmatpush1.bf16.msra.mxu0 0
          %1094 = vmatprep.subr.bf16.mxu0 0
          %1095 = vmatpush1.bf16.msra.mxu0 0
          %1096 = vmatprep.subr.bf16.mxu0 0
          %1097 = vmatpush1.bf16.msra.mxu0 0
          %1098 = vmatprep.subr.bf16.mxu0 0
          %1099 = vmatpush1.bf16.msra.mxu0 0
          %1100 = vmatprep.subr.bf16.mxu0 0
          %1101 = vmatpush1.bf16.msra.mxu0 0
          %1102 = vmatprep.subr.bf16.mxu0 0
          %1103 = vmatpush1.bf16.msra.mxu0 0
          %1104 = vmatprep.subr.bf16.mxu0 0
          %1105 = vmatpush1.bf16.msra.mxu0 0
          %1106 = vmatprep.mubr.bf16.mxu0 0
          %1107 = vmatmul.mubr.bf16.gmra.mrb[0].mxu0 %v1072
          %v1108 = vpop.f32.mrb[0].mxu0
          %v1109 = vadd.f32 %v1057, %v1108
          %v1110 = vpop.f32.mrb[0].mxu0
          %v1111 = vpop.f32.mrb[0].mxu0
          %v1112 = vpop.f32.mrb[0].mxu0
          %1113 = vdwg.mxu0
          %1114 = vst [vmem:[%s384] sm:$0xff] %v1109
        $region76: #{tpu_custom_call.1} parent=43 // pred_fallthru
          _
        %s1115 = sand.u32 %s197, 1
        %s1116 = scalar_lea.sflag [#allocation8], %s1115
        %s1117 = sand.u32 %s197, 1
        %s1118 = smul.addr %s1117, 8
        %s1119 = scalar_lea.vmem [#allocation17], %s1118
        // Predicated region
        $region77: #{tpu_custom_call.1} parent=43 // pred_check
          %p1120 = pneg %p207
        $region78: #{tpu_custom_call.1} parent=43 // pred_check_branch
          %1122 = sbr.rel (%p1120) target = $region80
        $region79: #{tpu_custom_call.1} parent=43 // pred_region
          %s1124 = ssub.s32 128, 128
          %1125 = vsyncadd %s1116, %s1124
          %s1126 = sadd.s32 %s34, %s33
          %s1127 = smul.addr %s1126, 128
          %s1128 = scalar_lea.hbm %s6, %s1127
          %s1130 = sshll.u32 %s1119, 4
          %s1131 = int_to_ptr.vmem [resolvable:$true] %s1130
          %1133 = dma.vmem_to_hbm [thread:$0]  %s1131, 128, %s1128, %s1116
        $region80: #{tpu_custom_call.1} parent=43 // pred_fallthru
          _
      $region44: #{tpu_custom_call.1} parent=5 // pred_fallthru
        _
      %p1134 = scmp.le.s32.totalorder 2, %s23
      // Predicated region
      $region81: #{tpu_custom_call.1} parent=5 // pred_check
        %p1135 = pneg %p1134
      $region82: #{tpu_custom_call.1} parent=5 // pred_check_branch
        %1137 = sbr.rel (%p1135) target = $region84
      $region83: #{tpu_custom_call.1} parent=5 // pred_region
        %s1138 = ssub.s32 %s23, 2
        // Predicated region
        $region85: #{tpu_custom_call.1} parent=83 // pred_check
          %p1139 = pneg %p213
        $region86: #{tpu_custom_call.1} parent=83 // pred_check_branch
          %1141 = sbr.rel (%p1139) target = $region88
        $region87: #{tpu_custom_call.1} parent=83 // pred_region
          %s1142 = sand.u32 %s198, 1
          %s1143 = scalar_lea.sflag [#allocation8], %s1142
          %s1144 = sand.u32 %s198, 1
          %s1145 = smul.addr %s1144, 8
          %s1146 = scalar_lea.vmem [#allocation17], %s1145
          %1147 = dma.done %s1143, 128
        $region88: #{tpu_custom_call.1} parent=83 // pred_fallthru
          _
      $region84: #{tpu_custom_call.1} parent=5 // pred_fallthru
        _
    $region6: #{tpu_custom_call.1} parent=1 // loop_footer
      %s27 = sadd.s32 1, %s23
    $region7: #{tpu_custom_call.1} parent=1 // loop_footer_branch
      %22 = sbr.rel target = $region3
    $region8: #{tpu_custom_call.1} parent=1 // loop_exit
      _
    %1148 = vsyncpa [#allocation7], 1
    %s1149 = scalar_lea.sflag [#allocation7], 1
    %1150 = vsyncpa %s1149, 1
    %1151 = vsyncpa [#allocation10], 1
    %s1152 = scalar_lea.sflag [#allocation10], 1
    %1153 = vsyncpa %s1152, 1
    %1154 = vsyncpa [#allocation13], 1
    %1155 = vsyncpa [#allocation16], 1
    %1156 = vsyncpa [#allocation8], 1
    %s1157 = scalar_lea.sflag [#allocation8], 1
    %1158 = vsyncpa %s1157, 1

</llo_original>
